<compile_context>
chip_gen: v6e
topology: v6e:2x2x1
jax: 0.10.0
libtpu: 0.0.40
codegen_flags: <defaults>
</compile_context>

<pallas_src>
import jax
import jax.numpy as jnp
from jax.experimental import pallas as pl
from jax.experimental.pallas import tpu as pltpu


def _round_up(n, m):
    return ((n + m - 1) // m) * m


# ----------------------------- Pallas kernel ---------------------------------
def dnn_kernel(x_ref,
               w1_ref, b1_ref,
               w2_ref, b2_ref,
               w3_ref, b3_ref,
               w4_ref, b4_ref,
               w5_ref, b5_ref,
               out_ref):
    # Whole MLP (5 matmuls + 4 bias+ReLU) fused in one body. Matmuls run in bf16
    # with f32 accumulation; elementwise bias/ReLU in f32.
    h = x_ref[...]                                                    # bf16 [tile, F_pad]

    h = jnp.dot(h, w1_ref[...], preferred_element_type=jnp.float32) + b1_ref[...]
    h = jnp.maximum(h, 0.0).astype(jnp.bfloat16)      # Dropout(0.3): identity in eval

    h = jnp.dot(h, w2_ref[...], preferred_element_type=jnp.float32) + b2_ref[...]
    h = jnp.maximum(h, 0.0).astype(jnp.bfloat16)      # Dropout(0.25): identity in eval

    h = jnp.dot(h, w3_ref[...], preferred_element_type=jnp.float32) + b3_ref[...]
    h = jnp.maximum(h, 0.0).astype(jnp.bfloat16)      # Dropout(0.25): identity in eval

    h = jnp.dot(h, w4_ref[...], preferred_element_type=jnp.float32) + b4_ref[...]
    h = jnp.maximum(h, 0.0).astype(jnp.bfloat16)      # Dropout(0.25): identity in eval

    out = jnp.dot(h, w5_ref[...], preferred_element_type=jnp.float32) + b5_ref[...]
    out_ref[...] = out.astype(out_ref.dtype)          # lane-dense (128-wide) store


# ------------------------------ Host wrapper ----------------------------------
def dnn_forward(x, params, *, batch_tile=512):
    """x: [B, num_features] float32. params: dict 'l1'..'l5' of (W[in,out], b[1,out])."""
    B, F = x.shape
    out_dim = params["l5"][0].shape[1]

    F_pad = _round_up(F, 128)           # 784 -> 896: aligned vector loads / MXU K passes
    out_pad = _round_up(out_dim, 128)   # 10 -> 128: unmasked, lane-dense output stores

    # ---- batch tiling: pad to multiple of 8, cap tile, keep >=2 grid steps (v7x) ----
    B8 = _round_up(B, 8)
    tile = _round_up(min(batch_tile, B8), 8)
    if B8 // tile < 2 and B8 >= 16:
        tile = _round_up((B8 + 1) // 2, 8)
    B_pad = _round_up(B8, tile)
    grid = (B_pad // tile,)

    # ---- host-side operand prep: zero padding, bf16 x/weights, f32 biases ----
    x_p = jnp.pad(x, ((0, B_pad - B), (0, F_pad - F))).astype(jnp.bfloat16)

    def prep(w, b, pad_in=0, pad_out=0):
        w_p = jnp.pad(w, ((0, pad_in), (0, pad_out))).astype(jnp.bfloat16)
        b_p = jnp.pad(jnp.reshape(b, (1, -1)), ((0, 0), (0, pad_out))).astype(jnp.float32)
        return w_p, b_p

    w1, b1 = prep(*params["l1"], pad_in=F_pad - F)
    w2, b2 = prep(*params["l2"])
    w3, b3 = prep(*params["l3"])
    w4, b4 = prep(*params["l4"])
    w5, b5 = prep(*params["l5"], pad_out=out_pad - out_dim)
    flat_params = (w1, b1, w2, b2, w3, b3, w4, b4, w5, b5)

    # ---- compiler params ----
    compiler_kwargs = {"dimension_semantics": ("parallel",)}
    stream_bytes = 2 * (tile * F_pad * 2 + tile * out_pad * 4)  # double-buffered x + out
    if stream_bytes > 8 * 1024 * 1024:
        # Very large batch tiles would bust v5e's 16 MiB scoped-VMEM default.
        compiler_kwargs["vmem_limit_bytes"] = 48 * 1024 * 1024

    def build(single_buffer_weights):
        def rep_spec(arr):
            # Grid-invariant operand: constant index_map; optionally single-buffered.
            if single_buffer_weights:
                return pl.BlockSpec(arr.shape, lambda i: (0, 0),
                                    pipeline_mode=pl.Buffered(1))
            return pl.BlockSpec(arr.shape, lambda i: (0, 0))

        return pl.pallas_call(
            dnn_kernel,
            out_shape=jax.ShapeDtypeStruct((B_pad, out_pad), jnp.float32),
            grid_spec=pltpu.PrefetchScalarGridSpec(
                num_scalar_prefetch=0,
                grid=grid,
                in_specs=[pl.BlockSpec((tile, F_pad), lambda i: (i, 0))]
                         + [rep_spec(a) for a in flat_params],
                out_specs=pl.BlockSpec((tile, out_pad), lambda i: (i, 0)),
            ),
            compiler_params=pltpu.CompilerParams(**compiler_kwargs),
        )

    try:
        # Preferred: weights/biases single-buffered (no per-step re-fetch bookkeeping).
        out_p = jax.block_until_ready(build(True)(x_p, *flat_params))
    except Exception:
        # Fallback for JAX versions where Buffered(1) is rejected for pallas_call specs.
        out_p = build(False)(x_p, *flat_params)

    return out_p[:B, :out_dim]


# --------------------------- Parameter construction ---------------------------
def init_params(key, num_features, output_dim):
    dims = [num_features, 128, 64, 64, 32, output_dim]
    params = {}
    for li in range(5):
        fan_in, fan_out = dims[li], dims[li + 1]
        key, kw, kb = jax.random.split(key, 3)
        # PyTorch nn.Linear default: U(-1/sqrt(fan_in), 1/sqrt(fan_in))
        bound = 1.0 / jnp.sqrt(jnp.float32(fan_in))
        w = jax.random.uniform(kw, (fan_in, fan_out), jnp.float32, -bound, bound)
        b = jax.random.uniform(kb, (1, fan_out), jnp.float32, -bound, bound)
        params[f"l{li + 1}"] = (w, b)
    return params


def dnn_reference(x, params):
    """Pure-JAX reference mirroring the kernel's bf16-input / f32-accumulate math."""
    h = x.astype(jnp.bfloat16).astype(jnp.float32)
    for name in ["l1", "l2", "l3", "l4"]:
        w, b = params[name]
        w = w.astype(jnp.bfloat16).astype(jnp.float32)
        h = jnp.maximum(h @ w + b, 0.0)
        h = h.astype(jnp.bfloat16).astype(jnp.float32)
    w, b = params["l5"]
    w = w.astype(jnp.bfloat16).astype(jnp.float32)
    return h @ w + b


# ----------------------------------- Main -------------------------------------
if __name__ == "__main__":
    num_features = 784   # Fashion-MNIST flattened 28x28
    output_dim = 10      # 10 classes
    batch = 32           # small test batch; grid still gets >=2 parallel steps

    key = jax.random.PRNGKey(0)
    key, kx = jax.random.split(key)
    x = jax.random.normal(kx, (batch, num_features), jnp.float32)
    params = init_params(key, num_features, output_dim)

    out = dnn_forward(x, params)
    out = jax.block_until_ready(out)

    ref = dnn_reference(x, params)
    assert out.shape == (batch, output_dim)
    assert jnp.allclose(out, ref, atol=1e-3, rtol=1e-3), "mismatch vs JAX reference"

    print("KERNEL_OK")
</pallas_src>

<mosaic_0001>
module attributes {stable_mosaic.version = 11 : i64} {
  func.func @dnn_kernel(%arg0: i32, %arg1: memref<16x896xbf16, #tpu.memory_space<vmem>>, %arg2: memref<896x128xbf16, #tpu.memory_space<vmem>>, %arg3: memref<1x128xf32, #tpu.memory_space<vmem>>, %arg4: memref<128x64xbf16, #tpu.memory_space<vmem>>, %arg5: memref<1x64xf32, #tpu.memory_space<vmem>>, %arg6: memref<64x64xbf16, #tpu.memory_space<vmem>>, %arg7: memref<1x64xf32, #tpu.memory_space<vmem>>, %arg8: memref<64x32xbf16, #tpu.memory_space<vmem>>, %arg9: memref<1x32xf32, #tpu.memory_space<vmem>>, %arg10: memref<32x128xbf16, #tpu.memory_space<vmem>>, %arg11: memref<1x128xf32, #tpu.memory_space<vmem>>, %arg12: memref<16x128xf32, #tpu.memory_space<vmem>>) attributes {dimension_semantics = [#tpu.dimension_semantics<parallel>], iteration_bounds = array<i64: 2>, scalar_prefetch = 0 : i64, scratch_operands = 0 : i64, tpu.core_type = #tpu.core_type<tc>, window_params = [{transform_indices = @transform_0, window_bounds = array<i64: 16, 896>}, {pipeline_mode = #tpu.pipeline_mode<synchronous>, transform_indices = @transform_1, window_bounds = array<i64: 896, 128>}, {pipeline_mode = #tpu.pipeline_mode<synchronous>, transform_indices = @transform_2, window_bounds = array<i64: 1, 128>}, {pipeline_mode = #tpu.pipeline_mode<synchronous>, transform_indices = @transform_3, window_bounds = array<i64: 128, 64>}, {pipeline_mode = #tpu.pipeline_mode<synchronous>, transform_indices = @transform_4, window_bounds = array<i64: 1, 64>}, {pipeline_mode = #tpu.pipeline_mode<synchronous>, transform_indices = @transform_5, window_bounds = array<i64: 64, 64>}, {pipeline_mode = #tpu.pipeline_mode<synchronous>, transform_indices = @transform_6, window_bounds = array<i64: 1, 64>}, {pipeline_mode = #tpu.pipeline_mode<synchronous>, transform_indices = @transform_7, window_bounds = array<i64: 64, 32>}, {pipeline_mode = #tpu.pipeline_mode<synchronous>, transform_indices = @transform_8, window_bounds = array<i64: 1, 32>}, {pipeline_mode = #tpu.pipeline_mode<synchronous>, transform_indices = @transform_9, window_bounds = array<i64: 32, 128>}, {pipeline_mode = #tpu.pipeline_mode<synchronous>, transform_indices = @transform_10, window_bounds = array<i64: 1, 128>}, {transform_indices = @transform_11, window_bounds = array<i64: 16, 128>}]} {
    %c0 = arith.constant 0 : index
    %c0_0 = arith.constant 0 : index
    %0 = vector.load %arg1[%c0, %c0_0] : memref<16x896xbf16, #tpu.memory_space<vmem>>, vector<16x896xbf16>
    %c0_1 = arith.constant 0 : index
    %c0_2 = arith.constant 0 : index
    %1 = vector.load %arg2[%c0_1, %c0_2] : memref<896x128xbf16, #tpu.memory_space<vmem>>, vector<896x128xbf16>
    %cst = arith.constant dense<0.000000e+00> : vector<16x128xf32>
    %2 = tpu.matmul %0, %1, %cst {dimension_numbers = #tpu.dot_dimension_numbers<[1], [0], [0], [1], [0, 0, 1, 1], [], []>} : vector<16x896xbf16>, vector<896x128xbf16>, vector<16x128xf32> -> vector<16x128xf32>
    %c0_3 = arith.constant 0 : index
    %c0_4 = arith.constant 0 : index
    %3 = vector.load %arg3[%c0_3, %c0_4] : memref<1x128xf32, #tpu.memory_space<vmem>>, vector<1x128xf32>
    %4 = vector.broadcast %3 : vector<1x128xf32> to vector<16x128xf32>
    %5 = arith.addf %2, %4 : vector<16x128xf32>
    %cst_5 = arith.constant 0.000000e+00 : f32
    %6 = vector.broadcast %cst_5 : f32 to vector<16x128xf32>
    %7 = arith.maximumf %5, %6 : vector<16x128xf32>
    %8 = arith.truncf %7 : vector<16x128xf32> to vector<16x128xbf16>
    %c0_6 = arith.constant 0 : index
    %c0_7 = arith.constant 0 : index
    %9 = vector.load %arg4[%c0_6, %c0_7] : memref<128x64xbf16, #tpu.memory_space<vmem>>, vector<128x64xbf16>
    %cst_8 = arith.constant dense<0.000000e+00> : vector<16x64xf32>
    %10 = tpu.matmul %8, %9, %cst_8 {dimension_numbers = #tpu.dot_dimension_numbers<[1], [0], [0], [1], [0, 0, 1, 1], [], []>} : vector<16x128xbf16>, vector<128x64xbf16>, vector<16x64xf32> -> vector<16x64xf32>
    %c0_9 = arith.constant 0 : index
    %c0_10 = arith.constant 0 : index
    %11 = vector.load %arg5[%c0_9, %c0_10] : memref<1x64xf32, #tpu.memory_space<vmem>>, vector<1x64xf32>
    %12 = vector.broadcast %11 : vector<1x64xf32> to vector<16x64xf32>
    %13 = arith.addf %10, %12 : vector<16x64xf32>
    %cst_11 = arith.constant 0.000000e+00 : f32
    %14 = vector.broadcast %cst_11 : f32 to vector<16x64xf32>
    %15 = arith.maximumf %13, %14 : vector<16x64xf32>
    %16 = arith.truncf %15 : vector<16x64xf32> to vector<16x64xbf16>
    %c0_12 = arith.constant 0 : index
    %c0_13 = arith.constant 0 : index
    %17 = vector.load %arg6[%c0_12, %c0_13] : memref<64x64xbf16, #tpu.memory_space<vmem>>, vector<64x64xbf16>
    %cst_14 = arith.constant dense<0.000000e+00> : vector<16x64xf32>
    %18 = tpu.matmul %16, %17, %cst_14 {dimension_numbers = #tpu.dot_dimension_numbers<[1], [0], [0], [1], [0, 0, 1, 1], [], []>} : vector<16x64xbf16>, vector<64x64xbf16>, vector<16x64xf32> -> vector<16x64xf32>
    %c0_15 = arith.constant 0 : index
    %c0_16 = arith.constant 0 : index
    %19 = vector.load %arg7[%c0_15, %c0_16] : memref<1x64xf32, #tpu.memory_space<vmem>>, vector<1x64xf32>
    %20 = vector.broadcast %19 : vector<1x64xf32> to vector<16x64xf32>
    %21 = arith.addf %18, %20 : vector<16x64xf32>
    %cst_17 = arith.constant 0.000000e+00 : f32
    %22 = vector.broadcast %cst_17 : f32 to vector<16x64xf32>
    %23 = arith.maximumf %21, %22 : vector<16x64xf32>
    %24 = arith.truncf %23 : vector<16x64xf32> to vector<16x64xbf16>
    %c0_18 = arith.constant 0 : index
    %c0_19 = arith.constant 0 : index
    %25 = vector.load %arg8[%c0_18, %c0_19] : memref<64x32xbf16, #tpu.memory_space<vmem>>, vector<64x32xbf16>
    %cst_20 = arith.constant dense<0.000000e+00> : vector<16x32xf32>
    %26 = tpu.matmul %24, %25, %cst_20 {dimension_numbers = #tpu.dot_dimension_numbers<[1], [0], [0], [1], [0, 0, 1, 1], [], []>} : vector<16x64xbf16>, vector<64x32xbf16>, vector<16x32xf32> -> vector<16x32xf32>
    %c0_21 = arith.constant 0 : index
    %c0_22 = arith.constant 0 : index
    %27 = vector.load %arg9[%c0_21, %c0_22] : memref<1x32xf32, #tpu.memory_space<vmem>>, vector<1x32xf32>
    %28 = vector.broadcast %27 : vector<1x32xf32> to vector<16x32xf32>
    %29 = arith.addf %26, %28 : vector<16x32xf32>
    %cst_23 = arith.constant 0.000000e+00 : f32
    %30 = vector.broadcast %cst_23 : f32 to vector<16x32xf32>
    %31 = arith.maximumf %29, %30 : vector<16x32xf32>
    %32 = arith.truncf %31 : vector<16x32xf32> to vector<16x32xbf16>
    %c0_24 = arith.constant 0 : index
    %c0_25 = arith.constant 0 : index
    %33 = vector.load %arg10[%c0_24, %c0_25] : memref<32x128xbf16, #tpu.memory_space<vmem>>, vector<32x128xbf16>
    %cst_26 = arith.constant dense<0.000000e+00> : vector<16x128xf32>
    %34 = tpu.matmul %32, %33, %cst_26 {dimension_numbers = #tpu.dot_dimension_numbers<[1], [0], [0], [1], [0, 0, 1, 1], [], []>} : vector<16x32xbf16>, vector<32x128xbf16>, vector<16x128xf32> -> vector<16x128xf32>
    %c0_27 = arith.constant 0 : index
    %c0_28 = arith.constant 0 : index
    %35 = vector.load %arg11[%c0_27, %c0_28] : memref<1x128xf32, #tpu.memory_space<vmem>>, vector<1x128xf32>
    %36 = vector.broadcast %35 : vector<1x128xf32> to vector<16x128xf32>
    %37 = arith.addf %34, %36 : vector<16x128xf32>
    %c0_29 = arith.constant 0 : index
    %c0_30 = arith.constant 0 : index
    %38 = vector.load %arg12[%c0_29, %c0_30] : memref<16x128xf32, #tpu.memory_space<vmem>>, vector<16x128xf32>
    tpu.vector_store %arg12[%c0_29, %c0_30], %37 {strides = array<i32>} : memref<16x128xf32, #tpu.memory_space<vmem>>, vector<16x128xf32>,
    return
  }
  func.func @transform_0(%arg0: i32) -> (i32, i32) {
    %c0_i32 = arith.constant 0 : i32
    %c0_i32_0 = arith.constant 0 : i32
    return %arg0, %c0_i32 : i32, i32
  }
  func.func @transform_1(%arg0: i32) -> (i32, i32) {
    %c0_i32 = arith.constant 0 : i32
    %c0_i32_0 = arith.constant 0 : i32
    %c0_i32_1 = arith.constant 0 : i32
    return %c0_i32, %c0_i32_0 : i32, i32
  }
  func.func @transform_2(%arg0: i32) -> (i32, i32) {
    %c0_i32 = arith.constant 0 : i32
    %c0_i32_0 = arith.constant 0 : i32
    %c0_i32_1 = arith.constant 0 : i32
    return %c0_i32, %c0_i32_0 : i32, i32
  }
  func.func @transform_3(%arg0: i32) -> (i32, i32) {
    %c0_i32 = arith.constant 0 : i32
    %c0_i32_0 = arith.constant 0 : i32
    %c0_i32_1 = arith.constant 0 : i32
    return %c0_i32, %c0_i32_0 : i32, i32
  }
  func.func @transform_4(%arg0: i32) -> (i32, i32) {
    %c0_i32 = arith.constant 0 : i32
    %c0_i32_0 = arith.constant 0 : i32
    %c0_i32_1 = arith.constant 0 : i32
    return %c0_i32, %c0_i32_0 : i32, i32
  }
  func.func @transform_5(%arg0: i32) -> (i32, i32) {
    %c0_i32 = arith.constant 0 : i32
    %c0_i32_0 = arith.constant 0 : i32
    %c0_i32_1 = arith.constant 0 : i32
    return %c0_i32, %c0_i32_0 : i32, i32
  }
  func.func @transform_6(%arg0: i32) -> (i32, i32) {
    %c0_i32 = arith.constant 0 : i32
    %c0_i32_0 = arith.constant 0 : i32
    %c0_i32_1 = arith.constant 0 : i32
    return %c0_i32, %c0_i32_0 : i32, i32
  }
  func.func @transform_7(%arg0: i32) -> (i32, i32) {
    %c0_i32 = arith.constant 0 : i32
    %c0_i32_0 = arith.constant 0 : i32
    %c0_i32_1 = arith.constant 0 : i32
    return %c0_i32, %c0_i32_0 : i32, i32
  }
  func.func @transform_8(%arg0: i32) -> (i32, i32) {
    %c0_i32 = arith.constant 0 : i32
    %c0_i32_0 = arith.constant 0 : i32
    %c0_i32_1 = arith.constant 0 : i32
    return %c0_i32, %c0_i32_0 : i32, i32
  }
  func.func @transform_9(%arg0: i32) -> (i32, i32) {
    %c0_i32 = arith.constant 0 : i32
    %c0_i32_0 = arith.constant 0 : i32
    %c0_i32_1 = arith.constant 0 : i32
    return %c0_i32, %c0_i32_0 : i32, i32
  }
  func.func @transform_10(%arg0: i32) -> (i32, i32) {
    %c0_i32 = arith.constant 0 : i32
    %c0_i32_0 = arith.constant 0 : i32
    %c0_i32_1 = arith.constant 0 : i32
    return %c0_i32, %c0_i32_0 : i32, i32
  }
  func.func @transform_11(%arg0: i32) -> (i32, i32) {
    %c0_i32 = arith.constant 0 : i32
    %c0_i32_0 = arith.constant 0 : i32
    return %arg0, %c0_i32 : i32, i32
  }
}

module attributes {stable_mosaic.version = 11 : i64} {
  func.func @dnn_kernel(%arg0: i32, %arg1: memref<16x896xbf16, #tpu.memory_space<vmem>>, %arg2: memref<896x128xbf16, #tpu.memory_space<vmem>>, %arg3: memref<1x128xf32, #tpu.memory_space<vmem>>, %arg4: memref<128x64xbf16, #tpu.memory_space<vmem>>, %arg5: memref<1x64xf32, #tpu.memory_space<vmem>>, %arg6: memref<64x64xbf16, #tpu.memory_space<vmem>>, %arg7: memref<1x64xf32, #tpu.memory_space<vmem>>, %arg8: memref<64x32xbf16, #tpu.memory_space<vmem>>, %arg9: memref<1x32xf32, #tpu.memory_space<vmem>>, %arg10: memref<32x128xbf16, #tpu.memory_space<vmem>>, %arg11: memref<1x128xf32, #tpu.memory_space<vmem>>, %arg12: memref<16x128xf32, #tpu.memory_space<vmem>>) attributes {dimension_semantics = [#tpu.dimension_semantics<parallel>], iteration_bounds = array<i64: 2>, scalar_prefetch = 0 : i64, scratch_operands = 0 : i64, tpu.core_type = #tpu.core_type<tc>, window_params = [{transform_indices = @transform_0, window_bounds = array<i64: 16, 896>}, {pipeline_mode = #tpu.pipeline_mode<synchronous>, transform_indices = @transform_1, window_bounds = array<i64: 896, 128>}, {pipeline_mode = #tpu.pipeline_mode<synchronous>, transform_indices = @transform_2, window_bounds = array<i64: 1, 128>}, {pipeline_mode = #tpu.pipeline_mode<synchronous>, transform_indices = @transform_3, window_bounds = array<i64: 128, 64>}, {pipeline_mode = #tpu.pipeline_mode<synchronous>, transform_indices = @transform_4, window_bounds = array<i64: 1, 64>}, {pipeline_mode = #tpu.pipeline_mode<synchronous>, transform_indices = @transform_5, window_bounds = array<i64: 64, 64>}, {pipeline_mode = #tpu.pipeline_mode<synchronous>, transform_indices = @transform_6, window_bounds = array<i64: 1, 64>}, {pipeline_mode = #tpu.pipeline_mode<synchronous>, transform_indices = @transform_7, window_bounds = array<i64: 64, 32>}, {pipeline_mode = #tpu.pipeline_mode<synchronous>, transform_indices = @transform_8, window_bounds = array<i64: 1, 32>}, {pipeline_mode = #tpu.pipeline_mode<synchronous>, transform_indices = @transform_9, window_bounds = array<i64: 32, 128>}, {pipeline_mode = #tpu.pipeline_mode<synchronous>, transform_indices = @transform_10, window_bounds = array<i64: 1, 128>}, {transform_indices = @transform_11, window_bounds = array<i64: 16, 128>}]} {
    %c0 = arith.constant 0 : index
    %c0_0 = arith.constant 0 : index
    %0 = vector.load %arg1[%c0, %c0_0] : memref<16x896xbf16, #tpu.memory_space<vmem>>, vector<16x896xbf16>
    %c0_1 = arith.constant 0 : index
    %c0_2 = arith.constant 0 : index
    %1 = vector.load %arg2[%c0_1, %c0_2] : memref<896x128xbf16, #tpu.memory_space<vmem>>, vector<896x128xbf16>
    %cst = arith.constant dense<0.000000e+00> : vector<16x128xf32>
    %2 = tpu.matmul %0, %1, %cst {dimension_numbers = #tpu.dot_dimension_numbers<[1], [0], [0], [1], [0, 0, 1, 1], [], []>} : vector<16x896xbf16>, vector<896x128xbf16>, vector<16x128xf32> -> vector<16x128xf32>
    %c0_3 = arith.constant 0 : index
    %c0_4 = arith.constant 0 : index
    %3 = vector.load %arg3[%c0_3, %c0_4] : memref<1x128xf32, #tpu.memory_space<vmem>>, vector<1x128xf32>
    %4 = vector.broadcast %3 : vector<1x128xf32> to vector<16x128xf32>
    %5 = arith.addf %2, %4 : vector<16x128xf32>
    %cst_5 = arith.constant 0.000000e+00 : f32
    %6 = vector.broadcast %cst_5 : f32 to vector<16x128xf32>
    %7 = arith.maximumf %5, %6 : vector<16x128xf32>
    %8 = arith.truncf %7 : vector<16x128xf32> to vector<16x128xbf16>
    %c0_6 = arith.constant 0 : index
    %c0_7 = arith.constant 0 : index
    %9 = vector.load %arg4[%c0_6, %c0_7] : memref<128x64xbf16, #tpu.memory_space<vmem>>, vector<128x64xbf16>
    %cst_8 = arith.constant dense<0.000000e+00> : vector<16x64xf32>
    %10 = tpu.matmul %8, %9, %cst_8 {dimension_numbers = #tpu.dot_dimension_numbers<[1], [0], [0], [1], [0, 0, 1, 1], [], []>} : vector<16x128xbf16>, vector<128x64xbf16>, vector<16x64xf32> -> vector<16x64xf32>
    %c0_9 = arith.constant 0 : index
    %c0_10 = arith.constant 0 : index
    %11 = vector.load %arg5[%c0_9, %c0_10] : memref<1x64xf32, #tpu.memory_space<vmem>>, vector<1x64xf32>
    %12 = vector.broadcast %11 : vector<1x64xf32> to vector<16x64xf32>
    %13 = arith.addf %10, %12 : vector<16x64xf32>
    %cst_11 = arith.constant 0.000000e+00 : f32
    %14 = vector.broadcast %cst_11 : f32 to vector<16x64xf32>
    %15 = arith.maximumf %13, %14 : vector<16x64xf32>
    %16 = arith.truncf %15 : vector<16x64xf32> to vector<16x64xbf16>
    %c0_12 = arith.constant 0 : index
    %c0_13 = arith.constant 0 : index
    %17 = vector.load %arg6[%c0_12, %c0_13] : memref<64x64xbf16, #tpu.memory_space<vmem>>, vector<64x64xbf16>
    %cst_14 = arith.constant dense<0.000000e+00> : vector<16x64xf32>
    %18 = tpu.matmul %16, %17, %cst_14 {dimension_numbers = #tpu.dot_dimension_numbers<[1], [0], [0], [1], [0, 0, 1, 1], [], []>} : vector<16x64xbf16>, vector<64x64xbf16>, vector<16x64xf32> -> vector<16x64xf32>
    %c0_15 = arith.constant 0 : index
    %c0_16 = arith.constant 0 : index
    %19 = vector.load %arg7[%c0_15, %c0_16] : memref<1x64xf32, #tpu.memory_space<vmem>>, vector<1x64xf32>
    %20 = vector.broadcast %19 : vector<1x64xf32> to vector<16x64xf32>
    %21 = arith.addf %18, %20 : vector<16x64xf32>
    %cst_17 = arith.constant 0.000000e+00 : f32
    %22 = vector.broadcast %cst_17 : f32 to vector<16x64xf32>
    %23 = arith.maximumf %21, %22 : vector<16x64xf32>
    %24 = arith.truncf %23 : vector<16x64xf32> to vector<16x64xbf16>
    %c0_18 = arith.constant 0 : index
    %c0_19 = arith.constant 0 : index
    %25 = vector.load %arg8[%c0_18, %c0_19] : memref<64x32xbf16, #tpu.memory_space<vmem>>, vector<64x32xbf16>
    %cst_20 = arith.constant dense<0.000000e+00> : vector<16x32xf32>
    %26 = tpu.matmul %24, %25, %cst_20 {dimension_numbers = #tpu.dot_dimension_numbers<[1], [0], [0], [1], [0, 0, 1, 1], [], []>} : vector<16x64xbf16>, vector<64x32xbf16>, vector<16x32xf32> -> vector<16x32xf32>
    %c0_21 = arith.constant 0 : index
    %c0_22 = arith.constant 0 : index
    %27 = vector.load %arg9[%c0_21, %c0_22] : memref<1x32xf32, #tpu.memory_space<vmem>>, vector<1x32xf32>
    %28 = vector.broadcast %27 : vector<1x32xf32> to vector<16x32xf32>
    %29 = arith.addf %26, %28 : vector<16x32xf32>
    %cst_23 = arith.constant 0.000000e+00 : f32
    %30 = vector.broadcast %cst_23 : f32 to vector<16x32xf32>
    %31 = arith.maximumf %29, %30 : vector<16x32xf32>
    %32 = arith.truncf %31 : vector<16x32xf32> to vector<16x32xbf16>
    %c0_24 = arith.constant 0 : index
    %c0_25 = arith.constant 0 : index
    %33 = vector.load %arg10[%c0_24, %c0_25] : memref<32x128xbf16, #tpu.memory_space<vmem>>, vector<32x128xbf16>
    %cst_26 = arith.constant dense<0.000000e+00> : vector<16x128xf32>
    %34 = tpu.matmul %32, %33, %cst_26 {dimension_numbers = #tpu.dot_dimension_numbers<[1], [0], [0], [1], [0, 0, 1, 1], [], []>} : vector<16x32xbf16>, vector<32x128xbf16>, vector<16x128xf32> -> vector<16x128xf32>
    %c0_27 = arith.constant 0 : index
    %c0_28 = arith.constant 0 : index
    %35 = vector.load %arg11[%c0_27, %c0_28] : memref<1x128xf32, #tpu.memory_space<vmem>>, vector<1x128xf32>
    %36 = vector.broadcast %35 : vector<1x128xf32> to vector<16x128xf32>
    %37 = arith.addf %34, %36 : vector<16x128xf32>
    %c0_29 = arith.constant 0 : index
    %c0_30 = arith.constant 0 : index
    %38 = vector.load %arg12[%c0_29, %c0_30] : memref<16x128xf32, #tpu.memory_space<vmem>>, vector<16x128xf32>
    tpu.vector_store %arg12[%c0_29, %c0_30], %37 {strides = array<i32>} : memref<16x128xf32, #tpu.memory_space<vmem>>, vector<16x128xf32>,
    return
  }
  func.func @transform_0(%arg0: i32) -> (i32, i32) {
    %c0_i32 = arith.constant 0 : i32
    %c0_i32_0 = arith.constant 0 : i32
    return %arg0, %c0_i32 : i32, i32
  }
  func.func @transform_1(%arg0: i32) -> (i32, i32) {
    %c0_i32 = arith.constant 0 : i32
    %c0_i32_0 = arith.constant 0 : i32
    %c0_i32_1 = arith.constant 0 : i32
    return %c0_i32, %c0_i32_0 : i32, i32
  }
  func.func @transform_2(%arg0: i32) -> (i32, i32) {
    %c0_i32 = arith.constant 0 : i32
    %c0_i32_0 = arith.constant 0 : i32
    %c0_i32_1 = arith.constant 0 : i32
    return %c0_i32, %c0_i32_0 : i32, i32
  }
  func.func @transform_3(%arg0: i32) -> (i32, i32) {
    %c0_i32 = arith.constant 0 : i32
    %c0_i32_0 = arith.constant 0 : i32
    %c0_i32_1 = arith.constant 0 : i32
    return %c0_i32, %c0_i32_0 : i32, i32
  }
  func.func @transform_4(%arg0: i32) -> (i32, i32) {
    %c0_i32 = arith.constant 0 : i32
    %c0_i32_0 = arith.constant 0 : i32
    %c0_i32_1 = arith.constant 0 : i32
    return %c0_i32, %c0_i32_0 : i32, i32
  }
  func.func @transform_5(%arg0: i32) -> (i32, i32) {
    %c0_i32 = arith.constant 0 : i32
    %c0_i32_0 = arith.constant 0 : i32
    %c0_i32_1 = arith.constant 0 : i32
    return %c0_i32, %c0_i32_0 : i32, i32
  }
  func.func @transform_6(%arg0: i32) -> (i32, i32) {
    %c0_i32 = arith.constant 0 : i32
    %c0_i32_0 = arith.constant 0 : i32
    %c0_i32_1 = arith.constant 0 : i32
    return %c0_i32, %c0_i32_0 : i32, i32
  }
  func.func @transform_7(%arg0: i32) -> (i32, i32) {
    %c0_i32 = arith.constant 0 : i32
    %c0_i32_0 = arith.constant 0 : i32
    %c0_i32_1 = arith.constant 0 : i32
    return %c0_i32, %c0_i32_0 : i32, i32
  }
  func.func @transform_8(%arg0: i32) -> (i32, i32) {
    %c0_i32 = arith.constant 0 : i32
    %c0_i32_0 = arith.constant 0 : i32
    %c0_i32_1 = arith.constant 0 : i32
    return %c0_i32, %c0_i32_0 : i32, i32
  }
  func.func @transform_9(%arg0: i32) -> (i32, i32) {
    %c0_i32 = arith.constant 0 : i32
    %c0_i32_0 = arith.constant 0 : i32
    %c0_i32_1 = arith.constant 0 : i32
    return %c0_i32, %c0_i32_0 : i32, i32
  }
  func.func @transform_10(%arg0: i32) -> (i32, i32) {
    %c0_i32 = arith.constant 0 : i32
    %c0_i32_0 = arith.constant 0 : i32
    %c0_i32_1 = arith.constant 0 : i32
    return %c0_i32, %c0_i32_0 : i32, i32
  }
  func.func @transform_11(%arg0: i32) -> (i32, i32) {
    %c0_i32 = arith.constant 0 : i32
    %c0_i32_0 = arith.constant 0 : i32
    return %arg0, %c0_i32 : i32, i32
  }
}

</mosaic_0001>

<llo_original>
// kernel: tpu_custom_call.1
$region0: #{tpu_custom_call.1}
  #allocation0 [shape = 'u32[]', space=smem, size = 0x4, offset = 0x4, fixed_abs, tag = 'smem constant byte address 0x4 - core index']
  #allocation1 [shape = 'u32[144,128]{1,0:T(1,128)}', space=vmem, size = 0x12000, scoped, tag = 'internal scratch']
  %s0 = inlined_call_operand.vmem [shape: bf16[32,896], index: 0, kind: input, shape index: {}]
  %s1 = inlined_call_operand.hbm [shape: bf16[896,128], index: 1, kind: input, shape index: {}]
  %s2 = inlined_call_operand.hbm [shape: f32[1,128], index: 2, kind: input, shape index: {}]
  %s3 = inlined_call_operand.vmem [shape: bf16[128,64], index: 3, kind: input, shape index: {}]
  %s4 = inlined_call_operand.hbm [shape: f32[1,64], index: 4, kind: input, shape index: {}]
  %s5 = inlined_call_operand.vmem [shape: bf16[64,64], index: 5, kind: input, shape index: {}]
  %s6 = inlined_call_operand.hbm [shape: f32[1,64], index: 6, kind: input, shape index: {}]
  %s7 = inlined_call_operand.vmem [shape: bf16[64,32], index: 7, kind: input, shape index: {}]
  %s8 = inlined_call_operand.hbm [shape: f32[1,32], index: 8, kind: input, shape index: {}]
  %s9 = inlined_call_operand.vmem [shape: bf16[32,128], index: 9, kind: input, shape index: {}]
  %s10 = inlined_call_operand.vmem [shape: f32[1,128], index: 10, kind: input, shape index: {}]
  %s11 = inlined_call_operand.hbm [shape: f32[32,128], index: 11, kind: output, shape index: {}]
  %s12 = sld [smem:[#allocation0]]
  $region97: #{tpu_custom_call.1} parent=0
    _
  %s14 = ssub.s32 1, %s12
  %s15 = scalar_select 0, %s14, %s12
  $region1: #{tpu_custom_call.1} parent=0
    #allocation2 [shape = 'u8[229376]{0}', space=vmem, size = 0x38000, scoped, tag = 'input window, operand 1, single buffered']
    #allocation3 [shape = 's32[2]{0}', space=sflag, size = 0x8, scoped, tag = 'scoped memory for tpu_custom_call.1']
    #allocation4 [shape = 's32[2]{0}', space=sflag, size = 0x8, scoped, tag = 'scoped memory for tpu_custom_call.1']
    #allocation5 [shape = 'u8[512]{0}', space=vmem, size = 0x400, scoped, tag = 'input window, operand 2, single buffered']
    #allocation6 [shape = 's32[1]{0}', space=sflag, size = 0x4, scoped, tag = 'scoped memory for tpu_custom_call.1']
    #allocation7 [shape = 'u8[512]{0}', space=vmem, size = 0x400, scoped, tag = 'input window, operand 4, single buffered']
    #allocation8 [shape = 'u8[512]{0}', space=vmem, size = 0x400, scoped, tag = 'input window, operand 6, single buffered']
    #allocation9 [shape = 's32[1]{0}', space=sflag, size = 0x4, scoped, tag = 'scoped memory for tpu_custom_call.1']
    #allocation10 [shape = 'u8[512]{0}', space=vmem, size = 0x400, scoped, tag = 'input window, operand 8, single buffered']
    #allocation11 [shape = 'u8[16384]{0}', space=vmem, size = 0x4000, scoped, tag = 'output window, operand 0']
    %16 = vsyncpa [#allocation3], 0
    %17 = vsyncpa [#allocation6], 0
    %18 = vsyncpa [#allocation9], 0
    %19 = vsyncpa [#allocation4], 0
    %s20 = scalar_lea.sflag [#allocation4], 1
    %21 = vsyncpa %s20, 0
    loop: start=0, step=1, limit=4
    $region2: #{tpu_custom_call.1} parent=1 // loop_pre_header
      _
    $region3: #{tpu_custom_call.1} parent=1 // loop_header
      %s23 = sphi 0, %s27
      %p24 = scmp.ge.s32.totalorder %s23, 4
      %s33 = sphi 0, %s35
      %s36 = sphi 0, %s33
      %s37 = sphi 0, %s36
      %s53 = sphi 0, %s37
      %s57 = sphi 0, %s57
      %s59 = sphi 0, %s57
      %s60 = sphi 0, %s59
      %s74 = sphi 0, %s60
      %s78 = sphi 0, %s78
      %s80 = sphi 0, %s78
      %s81 = sphi 0, %s80
      %s95 = sphi 0, %s81
      %s99 = sphi 0, %s99
      %s101 = sphi 0, %s99
      %s102 = sphi 0, %s101
      %s116 = sphi 0, %s102
      %s120 = sphi 0, %s120
      %s122 = sphi 0, %s120
      %s123 = sphi 0, %s122
      %s137 = sphi 0, %s123
      %s141 = sphi 0, %s141
      %s143 = sphi 0, %s141
      %s144 = sphi 0, %s143
      %s158 = sphi 0, %s144
      %s162 = sphi 0, %s162
      %s164 = sphi 0, %s162
      %s165 = sphi 0, %s164
      %s179 = sphi 0, %s165
      %s183 = sphi 0, %s183
      %s185 = sphi 0, %s183
      %s186 = sphi 0, %s185
      %s200 = sphi 0, %s186
      %s204 = sphi 0, %s204
      %s206 = sphi 0, %s204
      %s207 = sphi 0, %s206
      %s221 = sphi 0, %s207
      %s225 = sphi 0, %s225
      %s227 = sphi 0, %s225
      %s228 = sphi 0, %s227
      %s242 = sphi 0, %s228
      %s246 = sphi 0, %s246
      %s248 = sphi 0, %s246
      %s249 = sphi 0, %s248
      %s263 = sphi 0, %s249
      %s269 = sphi 0, %s271
      %s272 = sphi 0, %s269
      %s273 = sphi 0, %s272
      %s289 = sphi 0, %s273
    $region4: #{tpu_custom_call.1} parent=1 // loop_header_branch
      %26 = sbr.rel (%p24) target = $region8
    $region5: #{tpu_custom_call.1} parent=1 // loop_body
      %s28 = ssub.s32 %s23, 1
      %s29 = ssub.s32 %s23, 2
      %s30 = sadd.s32 %s23, 1
      %s31 = ssub.s32 %s23, %s30
      %p32 = scmp.eq.s32.totalorder %s31, 0
      %s34 = sadd.s32 %s33, 1
      %s35 = scalar_select %p32, %s33, %s34
      %p38 = pneg %p32
      %p39 = scmp.eq.s32.totalorder %s23, 1
      %p40 = por %p38, %p39
      %p41 = scmp.ne.s32.totalorder %s33, %s36
      %p42 = scmp.eq.s32.totalorder %s23, 0
      %p43 = por %p41, %p42
      %p44 = scmp.ne.s32.totalorder %s33, %s36
      %p45 = scmp.eq.s32.totalorder %s28, 1
      %p46 = por %p44, %p45
      %p47 = scmp.ne.s32.totalorder %s36, %s37
      %p48 = scmp.eq.s32.totalorder %s28, 0
      %p49 = por %p47, %p48
      %p50 = scmp.ne.s32.totalorder %s36, %s37
      %p51 = scmp.eq.s32.totalorder %s29, 1
      %p52 = por %p50, %p51
      %p54 = scmp.ne.s32.totalorder %s37, %s53
      %p55 = scmp.eq.s32.totalorder %s29, 0
      %p56 = por %p54, %p55
      %s58 = sadd.s32 %s57, 1
      %p61 = scmp.eq.s32.totalorder %s23, 1
      %p62 = scmp.ne.s32.totalorder %s57, %s59
      %p63 = scmp.eq.s32.totalorder %s23, 0
      %p64 = por %p62, %p63
      %p65 = scmp.ne.s32.totalorder %s57, %s59
      %p66 = scmp.eq.s32.totalorder %s28, 1
      %p67 = por %p65, %p66
      %p68 = scmp.ne.s32.totalorder %s59, %s60
      %p69 = scmp.eq.s32.totalorder %s28, 0
      %p70 = por %p68, %p69
      %p71 = scmp.ne.s32.totalorder %s59, %s60
      %p72 = scmp.eq.s32.totalorder %s29, 1
      %p73 = por %p71, %p72
      %p75 = scmp.ne.s32.totalorder %s60, %s74
      %p76 = scmp.eq.s32.totalorder %s29, 0
      %p77 = por %p75, %p76
      %s79 = sadd.s32 %s78, 1
      %p82 = scmp.eq.s32.totalorder %s23, 1
      %p83 = scmp.ne.s32.totalorder %s78, %s80
      %p84 = scmp.eq.s32.totalorder %s23, 0
      %p85 = por %p83, %p84
      %p86 = scmp.ne.s32.totalorder %s78, %s80
      %p87 = scmp.eq.s32.totalorder %s28, 1
      %p88 = por %p86, %p87
      %p89 = scmp.ne.s32.totalorder %s80, %s81
      %p90 = scmp.eq.s32.totalorder %s28, 0
      %p91 = por %p89, %p90
      %p92 = scmp.ne.s32.totalorder %s80, %s81
      %p93 = scmp.eq.s32.totalorder %s29, 1
      %p94 = por %p92, %p93
      %p96 = scmp.ne.s32.totalorder %s81, %s95
      %p97 = scmp.eq.s32.totalorder %s29, 0
      %p98 = por %p96, %p97
      %s100 = sadd.s32 %s99, 1
      %p103 = scmp.eq.s32.totalorder %s23, 1
      %p104 = scmp.ne.s32.totalorder %s99, %s101
      %p105 = scmp.eq.s32.totalorder %s23, 0
      %p106 = por %p104, %p105
      %p107 = scmp.ne.s32.totalorder %s99, %s101
      %p108 = scmp.eq.s32.totalorder %s28, 1
      %p109 = por %p107, %p108
      %p110 = scmp.ne.s32.totalorder %s101, %s102
      %p111 = scmp.eq.s32.totalorder %s28, 0
      %p112 = por %p110, %p111
      %p113 = scmp.ne.s32.totalorder %s101, %s102
      %p114 = scmp.eq.s32.totalorder %s29, 1
      %p115 = por %p113, %p114
      %p117 = scmp.ne.s32.totalorder %s102, %s116
      %p118 = scmp.eq.s32.totalorder %s29, 0
      %p119 = por %p117, %p118
      %s121 = sadd.s32 %s120, 1
      %p124 = scmp.eq.s32.totalorder %s23, 1
      %p125 = scmp.ne.s32.totalorder %s120, %s122
      %p126 = scmp.eq.s32.totalorder %s23, 0
      %p127 = por %p125, %p126
      %p128 = scmp.ne.s32.totalorder %s120, %s122
      %p129 = scmp.eq.s32.totalorder %s28, 1
      %p130 = por %p128, %p129
      %p131 = scmp.ne.s32.totalorder %s122, %s123
      %p132 = scmp.eq.s32.totalorder %s28, 0
      %p133 = por %p131, %p132
      %p134 = scmp.ne.s32.totalorder %s122, %s123
      %p135 = scmp.eq.s32.totalorder %s29, 1
      %p136 = por %p134, %p135
      %p138 = scmp.ne.s32.totalorder %s123, %s137
      %p139 = scmp.eq.s32.totalorder %s29, 0
      %p140 = por %p138, %p139
      %s142 = sadd.s32 %s141, 1
      %p145 = scmp.eq.s32.totalorder %s23, 1
      %p146 = scmp.ne.s32.totalorder %s141, %s143
      %p147 = scmp.eq.s32.totalorder %s23, 0
      %p148 = por %p146, %p147
      %p149 = scmp.ne.s32.totalorder %s141, %s143
      %p150 = scmp.eq.s32.totalorder %s28, 1
      %p151 = por %p149, %p150
      %p152 = scmp.ne.s32.totalorder %s143, %s144
      %p153 = scmp.eq.s32.totalorder %s28, 0
      %p154 = por %p152, %p153
      %p155 = scmp.ne.s32.totalorder %s143, %s144
      %p156 = scmp.eq.s32.totalorder %s29, 1
      %p157 = por %p155, %p156
      %p159 = scmp.ne.s32.totalorder %s144, %s158
      %p160 = scmp.eq.s32.totalorder %s29, 0
      %p161 = por %p159, %p160
      %s163 = sadd.s32 %s162, 1
      %p166 = scmp.eq.s32.totalorder %s23, 1
      %p167 = scmp.ne.s32.totalorder %s162, %s164
      %p168 = scmp.eq.s32.totalorder %s23, 0
      %p169 = por %p167, %p168
      %p170 = scmp.ne.s32.totalorder %s162, %s164
      %p171 = scmp.eq.s32.totalorder %s28, 1
      %p172 = por %p170, %p171
      %p173 = scmp.ne.s32.totalorder %s164, %s165
      %p174 = scmp.eq.s32.totalorder %s28, 0
      %p175 = por %p173, %p174
      %p176 = scmp.ne.s32.totalorder %s164, %s165
      %p177 = scmp.eq.s32.totalorder %s29, 1
      %p178 = por %p176, %p177
      %p180 = scmp.ne.s32.totalorder %s165, %s179
      %p181 = scmp.eq.s32.totalorder %s29, 0
      %p182 = por %p180, %p181
      %s184 = sadd.s32 %s183, 1
      %p187 = scmp.eq.s32.totalorder %s23, 1
      %p188 = scmp.ne.s32.totalorder %s183, %s185
      %p189 = scmp.eq.s32.totalorder %s23, 0
      %p190 = por %p188, %p189
      %p191 = scmp.ne.s32.totalorder %s183, %s185
      %p192 = scmp.eq.s32.totalorder %s28, 1
      %p193 = por %p191, %p192
      %p194 = scmp.ne.s32.totalorder %s185, %s186
      %p195 = scmp.eq.s32.totalorder %s28, 0
      %p196 = por %p194, %p195
      %p197 = scmp.ne.s32.totalorder %s185, %s186
      %p198 = scmp.eq.s32.totalorder %s29, 1
      %p199 = por %p197, %p198
      %p201 = scmp.ne.s32.totalorder %s186, %s200
      %p202 = scmp.eq.s32.totalorder %s29, 0
      %p203 = por %p201, %p202
      %s205 = sadd.s32 %s204, 1
      %p208 = scmp.eq.s32.totalorder %s23, 1
      %p209 = scmp.ne.s32.totalorder %s204, %s206
      %p210 = scmp.eq.s32.totalorder %s23, 0
      %p211 = por %p209, %p210
      %p212 = scmp.ne.s32.totalorder %s204, %s206
      %p213 = scmp.eq.s32.totalorder %s28, 1
      %p214 = por %p212, %p213
      %p215 = scmp.ne.s32.totalorder %s206, %s207
      %p216 = scmp.eq.s32.totalorder %s28, 0
      %p217 = por %p215, %p216
      %p218 = scmp.ne.s32.totalorder %s206, %s207
      %p219 = scmp.eq.s32.totalorder %s29, 1
      %p220 = por %p218, %p219
      %p222 = scmp.ne.s32.totalorder %s207, %s221
      %p223 = scmp.eq.s32.totalorder %s29, 0
      %p224 = por %p222, %p223
      %s226 = sadd.s32 %s225, 1
      %p229 = scmp.eq.s32.totalorder %s23, 1
      %p230 = scmp.ne.s32.totalorder %s225, %s227
      %p231 = scmp.eq.s32.totalorder %s23, 0
      %p232 = por %p230, %p231
      %p233 = scmp.ne.s32.totalorder %s225, %s227
      %p234 = scmp.eq.s32.totalorder %s28, 1
      %p235 = por %p233, %p234
      %p236 = scmp.ne.s32.totalorder %s227, %s228
      %p237 = scmp.eq.s32.totalorder %s28, 0
      %p238 = por %p236, %p237
      %p239 = scmp.ne.s32.totalorder %s227, %s228
      %p240 = scmp.eq.s32.totalorder %s29, 1
      %p241 = por %p239, %p240
      %p243 = scmp.ne.s32.totalorder %s228, %s242
      %p244 = scmp.eq.s32.totalorder %s29, 0
      %p245 = por %p243, %p244
      %s247 = sadd.s32 %s246, 1
      %p250 = scmp.eq.s32.totalorder %s23, 1
      %p251 = scmp.ne.s32.totalorder %s246, %s248
      %p252 = scmp.eq.s32.totalorder %s23, 0
      %p253 = por %p251, %p252
      %p254 = scmp.ne.s32.totalorder %s246, %s248
      %p255 = scmp.eq.s32.totalorder %s28, 1
      %p256 = por %p254, %p255
      %p257 = scmp.ne.s32.totalorder %s248, %s249
      %p258 = scmp.eq.s32.totalorder %s28, 0
      %p259 = por %p257, %p258
      %p260 = scmp.ne.s32.totalorder %s248, %s249
      %p261 = scmp.eq.s32.totalorder %s29, 1
      %p262 = por %p260, %p261
      %p264 = scmp.ne.s32.totalorder %s249, %s263
      %p265 = scmp.eq.s32.totalorder %s29, 0
      %p266 = por %p264, %p265
      %s267 = ssub.s32 %s23, %s30
      %p268 = scmp.eq.s32.totalorder %s267, 0
      %s270 = sadd.s32 %s269, 1
      %s271 = scalar_select %p268, %s269, %s270
      %p274 = pneg %p268
      %p275 = scmp.eq.s32.totalorder %s23, 1
      %p276 = por %p274, %p275
      %p277 = scmp.ne.s32.totalorder %s269, %s272
      %p278 = scmp.eq.s32.totalorder %s23, 0
      %p279 = por %p277, %p278
      %p280 = scmp.ne.s32.totalorder %s269, %s272
      %p281 = scmp.eq.s32.totalorder %s28, 1
      %p282 = por %p280, %p281
      %p283 = scmp.ne.s32.totalorder %s272, %s273
      %p284 = scmp.eq.s32.totalorder %s28, 0
      %p285 = por %p283, %p284
      %p286 = scmp.ne.s32.totalorder %s272, %s273
      %p287 = scmp.eq.s32.totalorder %s29, 1
      %p288 = por %p286, %p287
      %p290 = scmp.ne.s32.totalorder %s273, %s289
      %p291 = scmp.eq.s32.totalorder %s29, 0
      %p292 = por %p290, %p291
      %p293 = scmp.le.s32.totalorder 1, %s23
      %p294 = scmp.lt.s32.totalorder %s23, 3
      %p295 = pnand %p293, %p294
      %p296 = pneg %p295
      // Predicated region
      $region9: #{tpu_custom_call.1} parent=5 // pred_check
        _
      $region10: #{tpu_custom_call.1} parent=5 // pred_check_branch
        %298 = sbr.rel (%p295) target = $region12
      $region11: #{tpu_custom_call.1} parent=5 // pred_region
        %s299 = ssub.s32 %s23, 1
        // Predicated region
        $region13: #{tpu_custom_call.1} parent=11 // pred_check
          %p300 = pneg %p70
        $region14: #{tpu_custom_call.1} parent=11 // pred_check_branch
          %302 = sbr.rel (%p300) target = $region16
        $region15: #{tpu_custom_call.1} parent=11 // pred_region
          %s304 = ssub.s32 7168, 7168
          %305 = vsyncadd [#allocation3], %s304
          %s306 = sshll.u32 [#allocation2], 4
          %s307 = int_to_ptr.vmem [resolvable:$true] %s306
          %312 = dma.hbm_to_vmem [thread:$0]  %s1, 7168, %s307, [#allocation3], 64, 64, 4
        $region16: #{tpu_custom_call.1} parent=11 // pred_fallthru
          _
        // Predicated region
        $region17: #{tpu_custom_call.1} parent=11 // pred_check
          %p313 = pneg %p91
        $region18: #{tpu_custom_call.1} parent=11 // pred_check_branch
          %315 = sbr.rel (%p313) target = $region20
        $region19: #{tpu_custom_call.1} parent=11 // pred_region
          %s317 = ssub.s32 16, 16
          %318 = vsyncadd [#allocation6], %s317
          %s320 = sshll.u32 [#allocation5], 4
          %s321 = int_to_ptr.vmem [resolvable:$true] %s320
          %323 = dma.hbm_to_vmem [thread:$0]  %s2, 16, %s321, [#allocation6]
        $region20: #{tpu_custom_call.1} parent=11 // pred_fallthru
          _
        // Predicated region
        $region21: #{tpu_custom_call.1} parent=11 // pred_check
          %p324 = pneg %p112
        $region22: #{tpu_custom_call.1} parent=11 // pred_check_branch
          %326 = sbr.rel (%p324) target = $region24
        $region23: #{tpu_custom_call.1} parent=11 // pred_region
          _
        $region24: #{tpu_custom_call.1} parent=11 // pred_fallthru
          _
        // Predicated region
        $region25: #{tpu_custom_call.1} parent=11 // pred_check
          %p327 = pneg %p133
        $region26: #{tpu_custom_call.1} parent=11 // pred_check_branch
          %329 = sbr.rel (%p327) target = $region28
        $region27: #{tpu_custom_call.1} parent=11 // pred_region
          %s331 = ssub.s32 16, 16
          %332 = vsyncadd [#allocation6], %s331
          %s334 = sshll.u32 [#allocation7], 4
          %s335 = int_to_ptr.vmem [resolvable:$true] %s334
          %337 = dma.hbm_to_vmem [thread:$0]  %s4, 16, %s335, [#allocation6]
        $region28: #{tpu_custom_call.1} parent=11 // pred_fallthru
          _
        // Predicated region
        $region29: #{tpu_custom_call.1} parent=11 // pred_check
          %p338 = pneg %p154
        $region30: #{tpu_custom_call.1} parent=11 // pred_check_branch
          %340 = sbr.rel (%p338) target = $region32
        $region31: #{tpu_custom_call.1} parent=11 // pred_region
          _
        $region32: #{tpu_custom_call.1} parent=11 // pred_fallthru
          _
        // Predicated region
        $region33: #{tpu_custom_call.1} parent=11 // pred_check
          %p341 = pneg %p175
        $region34: #{tpu_custom_call.1} parent=11 // pred_check_branch
          %343 = sbr.rel (%p341) target = $region36
        $region35: #{tpu_custom_call.1} parent=11 // pred_region
          %s345 = ssub.s32 16, 16
          %346 = vsyncadd [#allocation9], %s345
          %s348 = sshll.u32 [#allocation8], 4
          %s349 = int_to_ptr.vmem [resolvable:$true] %s348
          %351 = dma.hbm_to_vmem [thread:$0]  %s6, 16, %s349, [#allocation9]
        $region36: #{tpu_custom_call.1} parent=11 // pred_fallthru
          _
        // Predicated region
        $region37: #{tpu_custom_call.1} parent=11 // pred_check
          %p352 = pneg %p196
        $region38: #{tpu_custom_call.1} parent=11 // pred_check_branch
          %354 = sbr.rel (%p352) target = $region40
        $region39: #{tpu_custom_call.1} parent=11 // pred_region
          _
        $region40: #{tpu_custom_call.1} parent=11 // pred_fallthru
          _
        // Predicated region
        $region41: #{tpu_custom_call.1} parent=11 // pred_check
          %p355 = pneg %p217
        $region42: #{tpu_custom_call.1} parent=11 // pred_check_branch
          %357 = sbr.rel (%p355) target = $region44
        $region43: #{tpu_custom_call.1} parent=11 // pred_region
          %s359 = ssub.s32 16, 16
          %360 = vsyncadd [#allocation9], %s359
          %s362 = sshll.u32 [#allocation10], 4
          %s363 = int_to_ptr.vmem [resolvable:$true] %s362
          %365 = dma.hbm_to_vmem [thread:$0]  %s8, 16, %s363, [#allocation9]
        $region44: #{tpu_custom_call.1} parent=11 // pred_fallthru
          _
        // Predicated region
        $region45: #{tpu_custom_call.1} parent=11 // pred_check
          %p366 = pneg %p238
        $region46: #{tpu_custom_call.1} parent=11 // pred_check_branch
          %368 = sbr.rel (%p366) target = $region48
        $region47: #{tpu_custom_call.1} parent=11 // pred_region
          _
        $region48: #{tpu_custom_call.1} parent=11 // pred_fallthru
          _
        // Predicated region
        $region49: #{tpu_custom_call.1} parent=11 // pred_check
          %p369 = pneg %p259
        $region50: #{tpu_custom_call.1} parent=11 // pred_check_branch
          %371 = sbr.rel (%p369) target = $region52
        $region51: #{tpu_custom_call.1} parent=11 // pred_region
          _
        $region52: #{tpu_custom_call.1} parent=11 // pred_fallthru
          _
      $region12: #{tpu_custom_call.1} parent=5 // pred_fallthru
        _
      %p372 = scmp.lt.s32.totalorder %s23, 2
      // Predicated region
      $region53: #{tpu_custom_call.1} parent=5 // pred_check
        %p373 = pneg %p372
      $region54: #{tpu_custom_call.1} parent=5 // pred_check_branch
        %375 = sbr.rel (%p373) target = $region56
      $region55: #{tpu_custom_call.1} parent=5 // pred_region
        // Predicated region
        $region57: #{tpu_custom_call.1} parent=55 // pred_check
          %p376 = pneg %p43
        $region58: #{tpu_custom_call.1} parent=55 // pred_check_branch
          %378 = sbr.rel (%p376) target = $region60
        $region59: #{tpu_custom_call.1} parent=55 // pred_region
          %s379 = smul.u32 2, %s23
          %p380 = scmp.lt.s32.totalorder %s379, 3
          %s381 = scalar_select %p380, %s379, 3
          %s382 = smul.addr %s381, 7
          %s383 = smul.addr %s382, 4
          %s384 = scalar_lea.vmem %s0, %s383
          %s385 = smul.u32 2, %s23
        $region60: #{tpu_custom_call.1} parent=55 // pred_fallthru
          _
      $region56: #{tpu_custom_call.1} parent=5 // pred_fallthru
        _
      %p386 = scmp.le.s32.totalorder 1, %s23
      %p387 = scmp.lt.s32.totalorder %s23, 3
      %p388 = pnand %p386, %p387
      %p389 = pneg %p388
      // Predicated region
      $region61: #{tpu_custom_call.1} parent=5 // pred_check
        _
      $region62: #{tpu_custom_call.1} parent=5 // pred_check_branch
        %391 = sbr.rel (%p388) target = $region64
      $region63: #{tpu_custom_call.1} parent=5 // pred_region
        %s392 = ssub.s32 %s23, 1
        // Predicated region
        $region65: #{tpu_custom_call.1} parent=63 // pred_check
          %p393 = pneg %p70
        $region66: #{tpu_custom_call.1} parent=63 // pred_check_branch
          %395 = sbr.rel (%p393) target = $region68
        $region67: #{tpu_custom_call.1} parent=63 // pred_region
          %396 = dma.done [#allocation3], 7168
        $region68: #{tpu_custom_call.1} parent=63 // pred_fallthru
          _
        // Predicated region
        $region69: #{tpu_custom_call.1} parent=63 // pred_check
          %p397 = pneg %p91
        $region70: #{tpu_custom_call.1} parent=63 // pred_check_branch
          %399 = sbr.rel (%p397) target = $region72
        $region71: #{tpu_custom_call.1} parent=63 // pred_region
          %400 = dma.done [#allocation6], 16
        $region72: #{tpu_custom_call.1} parent=63 // pred_fallthru
          _
        // Predicated region
        $region73: #{tpu_custom_call.1} parent=63 // pred_check
          %p401 = pneg %p133
        $region74: #{tpu_custom_call.1} parent=63 // pred_check_branch
          %403 = sbr.rel (%p401) target = $region76
        $region75: #{tpu_custom_call.1} parent=63 // pred_region
          %404 = dma.done [#allocation6], 16
        $region76: #{tpu_custom_call.1} parent=63 // pred_fallthru
          _
        // Predicated region
        $region77: #{tpu_custom_call.1} parent=63 // pred_check
          %p405 = pneg %p175
        $region78: #{tpu_custom_call.1} parent=63 // pred_check_branch
          %407 = sbr.rel (%p405) target = $region80
        $region79: #{tpu_custom_call.1} parent=63 // pred_region
          %408 = dma.done [#allocation9], 16
        $region80: #{tpu_custom_call.1} parent=63 // pred_fallthru
          _
        // Predicated region
        $region81: #{tpu_custom_call.1} parent=63 // pred_check
          %p409 = pneg %p217
        $region82: #{tpu_custom_call.1} parent=63 // pred_check_branch
          %411 = sbr.rel (%p409) target = $region84
        $region83: #{tpu_custom_call.1} parent=63 // pred_region
          %412 = dma.done [#allocation9], 16
        $region84: #{tpu_custom_call.1} parent=63 // pred_fallthru
          _
        %s413 = smul.u32 2, %s28
        %p414 = scmp.lt.s32.totalorder %s413, 3
        %s415 = scalar_select %p414, %s413, 3
        %s416 = smul.addr %s415, 7
        %s417 = smul.addr %s416, 4
        %s418 = scalar_lea.vmem %s0, %s417
        %p419 = pneg %p49
        %p420 = pneg %p46
        %p421 = pneg %p70
        %p422 = pneg %p67
        %p423 = pneg %p91
        %p424 = pneg %p88
        %p425 = pneg %p112
        %p426 = pneg %p109
        %p427 = pneg %p133
        %p428 = pneg %p130
        %p429 = pneg %p154
        %p430 = pneg %p151
        %p431 = pneg %p175
        %p432 = pneg %p172
        %p433 = pneg %p196
        %p434 = pneg %p193
        %p435 = pneg %p217
        %p436 = pneg %p214
        %p437 = pneg %p238
        %p438 = pneg %p235
        %p439 = pneg %p259
        %p440 = pneg %p256
        %p441 = pneg %p285
        %p442 = pneg %p282
        %s443 = sand.u32 %s272, 1
        %s444 = scalar_lea.sflag [#allocation4], %s443
        %s445 = sand.u32 %s272, 1
        %s446 = smul.addr %s445, 16
        %s447 = scalar_lea.vmem [#allocation11], %s446
        %s448 = smul.u32 2, %s28
        %p449 = scmp.lt.s32.totalorder %s448, 3
        %s450 = scalar_select %p449, %s448, 3
        %s451 = smul.addr %s450, 7
        %s452 = smul.addr %s451, 4
        %s453 = scalar_lea.vmem %s0, %s452
        %s454 = smul.u32 2, %s28
        %s455 = smul.u32 2, %s28
        %v457 = vld [vmem:[%s453] sm:$0xff]
        %v458 = vld [vmem:[%s453 + $0x8] sm:$0xff]
        %v459 = vld [vmem:[%s453 + $0x10] sm:$0xff]
        %v460 = vld [vmem:[%s453 + $0x18] sm:$0xf]
        %v461 = vld [vmem:[%s453 + $0x1c] sm:$0xff]
        %v462 = vld [vmem:[%s453 + $0x24] sm:$0xff]
        %v463 = vld [vmem:[%s453 + $0x2c] sm:$0xff]
        %v464 = vld [vmem:[%s453 + $0x34] sm:$0xf]
        %v465 = vld [vmem:[#allocation2] sm:$0xf]
        %v466 = vld [vmem:[#allocation2 + $0x4] sm:$0xf]
        %v467 = vld [vmem:[#allocation2 + $0x8] sm:$0xf]
        %v468 = vld [vmem:[#allocation2 + $0xc] sm:$0xf]
        %v469 = vld [vmem:[#allocation2 + $0x10] sm:$0xf]
        %v470 = vld [vmem:[#allocation2 + $0x14] sm:$0xf]
        %v471 = vld [vmem:[#allocation2 + $0x18] sm:$0xf]
        %v472 = vld [vmem:[#allocation2 + $0x1c] sm:$0xf]
        %v473 = vld [vmem:[#allocation2 + $0x20] sm:$0xf]
        %v474 = vld [vmem:[#allocation2 + $0x24] sm:$0xf]
        %v475 = vld [vmem:[#allocation2 + $0x28] sm:$0xf]
        %v476 = vld [vmem:[#allocation2 + $0x2c] sm:$0xf]
        %v477 = vld [vmem:[#allocation2 + $0x30] sm:$0xf]
        %v478 = vld [vmem:[#allocation2 + $0x34] sm:$0xf]
        %v479 = vld [vmem:[#allocation2 + $0x38] sm:$0xf]
        %v480 = vld [vmem:[#allocation2 + $0x3c] sm:$0xf]
        %v481 = vld [vmem:[#allocation2 + $0x40] sm:$0xf]
        %v482 = vld [vmem:[#allocation2 + $0x44] sm:$0xf]
        %v483 = vld [vmem:[#allocation2 + $0x48] sm:$0xf]
        %v484 = vld [vmem:[#allocation2 + $0x4c] sm:$0xf]
        %v485 = vld [vmem:[#allocation2 + $0x50] sm:$0xf]
        %v486 = vld [vmem:[#allocation2 + $0x54] sm:$0xf]
        %v487 = vld [vmem:[#allocation2 + $0x58] sm:$0xf]
        %v488 = vld [vmem:[#allocation2 + $0x5c] sm:$0xf]
        %v489 = vld [vmem:[#allocation2 + $0x60] sm:$0xf]
        %v490 = vld [vmem:[#allocation2 + $0x64] sm:$0xf]
        %v491 = vld [vmem:[#allocation2 + $0x68] sm:$0xf]
        %v492 = vld [vmem:[#allocation2 + $0x6c] sm:$0xf]
        %v493 = vld [vmem:[#allocation2 + $0x70] sm:$0xf]
        %v494 = vld [vmem:[#allocation2 + $0x74] sm:$0xf]
        %v495 = vld [vmem:[#allocation2 + $0x78] sm:$0xf]
        %v496 = vld [vmem:[#allocation2 + $0x7c] sm:$0xf]
        %v497 = vld [vmem:[#allocation2 + $0x80] sm:$0xf]
        %v498 = vld [vmem:[#allocation2 + $0x84] sm:$0xf]
        %v499 = vld [vmem:[#allocation2 + $0x88] sm:$0xf]
        %v500 = vld [vmem:[#allocation2 + $0x8c] sm:$0xf]
        %v501 = vld [vmem:[#allocation2 + $0x90] sm:$0xf]
        %v502 = vld [vmem:[#allocation2 + $0x94] sm:$0xf]
        %v503 = vld [vmem:[#allocation2 + $0x98] sm:$0xf]
        %v504 = vld [vmem:[#allocation2 + $0x9c] sm:$0xf]
        %v505 = vld [vmem:[#allocation2 + $0xa0] sm:$0xf]
        %v506 = vld [vmem:[#allocation2 + $0xa4] sm:$0xf]
        %v507 = vld [vmem:[#allocation2 + $0xa8] sm:$0xf]
        %v508 = vld [vmem:[#allocation2 + $0xac] sm:$0xf]
        %v509 = vld [vmem:[#allocation2 + $0xb0] sm:$0xf]
        %v510 = vld [vmem:[#allocation2 + $0xb4] sm:$0xf]
        %v511 = vld [vmem:[#allocation2 + $0xb8] sm:$0xf]
        %v512 = vld [vmem:[#allocation2 + $0xbc] sm:$0xf]
        %v513 = vld [vmem:[#allocation2 + $0xc0] sm:$0xf]
        %v514 = vld [vmem:[#allocation2 + $0xc4] sm:$0xf]
        %v515 = vld [vmem:[#allocation2 + $0xc8] sm:$0xf]
        %v516 = vld [vmem:[#allocation2 + $0xcc] sm:$0xf]
        %v517 = vld [vmem:[#allocation2 + $0xd0] sm:$0xf]
        %v518 = vld [vmem:[#allocation2 + $0xd4] sm:$0xf]
        %v519 = vld [vmem:[#allocation2 + $0xd8] sm:$0xf]
        %v520 = vld [vmem:[#allocation2 + $0xdc] sm:$0xf]
        %v521 = vld [vmem:[#allocation2 + $0xe0] sm:$0xf]
        %v522 = vld [vmem:[#allocation2 + $0xe4] sm:$0xf]
        %v523 = vld [vmem:[#allocation2 + $0xe8] sm:$0xf]
        %v524 = vld [vmem:[#allocation2 + $0xec] sm:$0xf]
        %v525 = vld [vmem:[#allocation2 + $0xf0] sm:$0xf]
        %v526 = vld [vmem:[#allocation2 + $0xf4] sm:$0xf]
        %v527 = vld [vmem:[#allocation2 + $0xf8] sm:$0xf]
        %v528 = vld [vmem:[#allocation2 + $0xfc] sm:$0xf]
        %v529 = vld [vmem:[#allocation2 + $0x100] sm:$0xf]
        %v530 = vld [vmem:[#allocation2 + $0x104] sm:$0xf]
        %v531 = vld [vmem:[#allocation2 + $0x108] sm:$0xf]
        %v532 = vld [vmem:[#allocation2 + $0x10c] sm:$0xf]
        %v533 = vld [vmem:[#allocation2 + $0x110] sm:$0xf]
        %v534 = vld [vmem:[#allocation2 + $0x114] sm:$0xf]
        %v535 = vld [vmem:[#allocation2 + $0x118] sm:$0xf]
        %v536 = vld [vmem:[#allocation2 + $0x11c] sm:$0xf]
        %v537 = vld [vmem:[#allocation2 + $0x120] sm:$0xf]
        %v538 = vld [vmem:[#allocation2 + $0x124] sm:$0xf]
        %v539 = vld [vmem:[#allocation2 + $0x128] sm:$0xf]
        %v540 = vld [vmem:[#allocation2 + $0x12c] sm:$0xf]
        %v541 = vld [vmem:[#allocation2 + $0x130] sm:$0xf]
        %v542 = vld [vmem:[#allocation2 + $0x134] sm:$0xf]
        %v543 = vld [vmem:[#allocation2 + $0x138] sm:$0xf]
        %v544 = vld [vmem:[#allocation2 + $0x13c] sm:$0xf]
        %v545 = vld [vmem:[#allocation2 + $0x140] sm:$0xf]
        %v546 = vld [vmem:[#allocation2 + $0x144] sm:$0xf]
        %v547 = vld [vmem:[#allocation2 + $0x148] sm:$0xf]
        %v548 = vld [vmem:[#allocation2 + $0x14c] sm:$0xf]
        %v549 = vld [vmem:[#allocation2 + $0x150] sm:$0xf]
        %v550 = vld [vmem:[#allocation2 + $0x154] sm:$0xf]
        %v551 = vld [vmem:[#allocation2 + $0x158] sm:$0xf]
        %v552 = vld [vmem:[#allocation2 + $0x15c] sm:$0xf]
        %v553 = vld [vmem:[#allocation2 + $0x160] sm:$0xf]
        %v554 = vld [vmem:[#allocation2 + $0x164] sm:$0xf]
        %v555 = vld [vmem:[#allocation2 + $0x168] sm:$0xf]
        %v556 = vld [vmem:[#allocation2 + $0x16c] sm:$0xf]
        %v557 = vld [vmem:[#allocation2 + $0x170] sm:$0xf]
        %v558 = vld [vmem:[#allocation2 + $0x174] sm:$0xf]
        %v559 = vld [vmem:[#allocation2 + $0x178] sm:$0xf]
        %v560 = vld [vmem:[#allocation2 + $0x17c] sm:$0xf]
        %v561 = vld [vmem:[#allocation2 + $0x180] sm:$0xf]
        %v562 = vld [vmem:[#allocation2 + $0x184] sm:$0xf]
        %v563 = vld [vmem:[#allocation2 + $0x188] sm:$0xf]
        %v564 = vld [vmem:[#allocation2 + $0x18c] sm:$0xf]
        %v565 = vld [vmem:[#allocation2 + $0x190] sm:$0xf]
        %v566 = vld [vmem:[#allocation2 + $0x194] sm:$0xf]
        %v567 = vld [vmem:[#allocation2 + $0x198] sm:$0xf]
        %v568 = vld [vmem:[#allocation2 + $0x19c] sm:$0xf]
        %v569 = vld [vmem:[#allocation2 + $0x1a0] sm:$0xf]
        %v570 = vld [vmem:[#allocation2 + $0x1a4] sm:$0xf]
        %v571 = vld [vmem:[#allocation2 + $0x1a8] sm:$0xf]
        %v572 = vld [vmem:[#allocation2 + $0x1ac] sm:$0xf]
        %v573 = vld [vmem:[#allocation2 + $0x1b0] sm:$0xf]
        %v574 = vld [vmem:[#allocation2 + $0x1b4] sm:$0xf]
        %v575 = vld [vmem:[#allocation2 + $0x1b8] sm:$0xf]
        %v576 = vld [vmem:[#allocation2 + $0x1bc] sm:$0xf]
        %v577 = vld [vmem:[#allocation5] sm:$0x1]
        %v579 = vlaneseq
        %v580 = vshrl.u32 %v579, 7
        %v581 = vsub.s32 0, %v580
        %v582 = vrot.slane %v577, %v581
        %v592 = vunpack.c.l.b16 %v457
        %v593 = vunpack.c.h.b16 %v457
        %v594 = vunpack.c.l.b16 %v458
        %v595 = vunpack.c.h.b16 %v458
        %v596 = vunpack.c.l.b16 %v459
        %v597 = vunpack.c.h.b16 %v459
        %v598 = vunpack.c.l.b16 %v460
        %v599 = vunpack.c.l.b16 %v461
        %v600 = vunpack.c.h.b16 %v461
        %v601 = vunpack.c.l.b16 %v462
        %v602 = vunpack.c.h.b16 %v462
        %v603 = vunpack.c.l.b16 %v463
        %v604 = vunpack.c.h.b16 %v463
        %v605 = vunpack.c.l.b16 %v464
        %v606 = vpack.c.b16 %v599, %v592
        %v607 = vpack.c.b16 %v600, %v593
        %v608 = vpack.c.b16 %v601, %v594
        %v609 = vpack.c.b16 %v602, %v595
        %v610 = vpack.c.b16 %v603, %v596
        %v611 = vpack.c.b16 %v604, %v597
        %v612 = vpack.c.b16 %v605, %v598
        %v732 = vunpack.c.l.b16 %v465
        %v733 = vunpack.c.l.b16 %v466
        %v734 = vunpack.c.l.b16 %v467
        %v735 = vunpack.c.l.b16 %v468
        %v736 = vunpack.c.l.b16 %v469
        %v737 = vunpack.c.l.b16 %v470
        %v738 = vunpack.c.l.b16 %v471
        %v739 = vunpack.c.l.b16 %v472
        %v740 = vunpack.c.l.b16 %v473
        %v741 = vunpack.c.l.b16 %v474
        %v742 = vunpack.c.l.b16 %v475
        %v743 = vunpack.c.l.b16 %v476
        %v744 = vunpack.c.l.b16 %v477
        %v745 = vunpack.c.l.b16 %v478
        %v746 = vunpack.c.l.b16 %v479
        %v747 = vunpack.c.l.b16 %v480
        %v748 = vunpack.c.l.b16 %v481
        %v749 = vunpack.c.l.b16 %v482
        %v750 = vunpack.c.l.b16 %v483
        %v751 = vunpack.c.l.b16 %v484
        %v752 = vunpack.c.l.b16 %v485
        %v753 = vunpack.c.l.b16 %v486
        %v754 = vunpack.c.l.b16 %v487
        %v755 = vunpack.c.l.b16 %v488
        %v756 = vunpack.c.l.b16 %v489
        %v757 = vunpack.c.l.b16 %v490
        %v758 = vunpack.c.l.b16 %v491
        %v759 = vunpack.c.l.b16 %v492
        %v760 = vunpack.c.l.b16 %v493
        %v761 = vunpack.c.l.b16 %v494
        %v762 = vunpack.c.l.b16 %v495
        %v763 = vunpack.c.l.b16 %v496
        %v764 = vunpack.c.l.b16 %v497
        %v765 = vunpack.c.l.b16 %v498
        %v766 = vunpack.c.l.b16 %v499
        %v767 = vunpack.c.l.b16 %v500
        %v768 = vunpack.c.l.b16 %v501
        %v769 = vunpack.c.l.b16 %v502
        %v770 = vunpack.c.l.b16 %v503
        %v771 = vunpack.c.l.b16 %v504
        %v772 = vunpack.c.l.b16 %v505
        %v773 = vunpack.c.l.b16 %v506
        %v774 = vunpack.c.l.b16 %v507
        %v775 = vunpack.c.l.b16 %v508
        %v776 = vunpack.c.l.b16 %v509
        %v777 = vunpack.c.l.b16 %v510
        %v778 = vunpack.c.l.b16 %v511
        %v779 = vunpack.c.l.b16 %v512
        %v780 = vunpack.c.l.b16 %v513
        %v781 = vunpack.c.l.b16 %v514
        %v782 = vunpack.c.l.b16 %v515
        %v783 = vunpack.c.l.b16 %v516
        %v784 = vunpack.c.l.b16 %v517
        %v785 = vunpack.c.l.b16 %v518
        %v786 = vunpack.c.l.b16 %v519
        %v787 = vunpack.c.l.b16 %v520
        %v788 = vunpack.c.l.b16 %v521
        %v789 = vunpack.c.l.b16 %v522
        %v790 = vunpack.c.l.b16 %v523
        %v791 = vunpack.c.l.b16 %v524
        %v792 = vunpack.c.l.b16 %v525
        %v793 = vunpack.c.l.b16 %v526
        %v794 = vunpack.c.l.b16 %v527
        %v795 = vunpack.c.l.b16 %v528
        %v796 = vunpack.c.l.b16 %v529
        %v797 = vunpack.c.l.b16 %v530
        %v798 = vunpack.c.l.b16 %v531
        %v799 = vunpack.c.l.b16 %v532
        %v800 = vunpack.c.l.b16 %v533
        %v801 = vunpack.c.l.b16 %v534
        %v802 = vunpack.c.l.b16 %v535
        %v803 = vunpack.c.l.b16 %v536
        %v804 = vunpack.c.l.b16 %v537
        %v805 = vunpack.c.l.b16 %v538
        %v806 = vunpack.c.l.b16 %v539
        %v807 = vunpack.c.l.b16 %v540
        %v808 = vunpack.c.l.b16 %v541
        %v809 = vunpack.c.l.b16 %v542
        %v810 = vunpack.c.l.b16 %v543
        %v811 = vunpack.c.l.b16 %v544
        %v812 = vunpack.c.l.b16 %v545
        %v813 = vunpack.c.l.b16 %v546
        %v814 = vunpack.c.l.b16 %v547
        %v815 = vunpack.c.l.b16 %v548
        %v816 = vunpack.c.l.b16 %v549
        %v817 = vunpack.c.l.b16 %v550
        %v818 = vunpack.c.l.b16 %v551
        %v819 = vunpack.c.l.b16 %v552
        %v820 = vunpack.c.l.b16 %v553
        %v821 = vunpack.c.l.b16 %v554
        %v822 = vunpack.c.l.b16 %v555
        %v823 = vunpack.c.l.b16 %v556
        %v824 = vunpack.c.l.b16 %v557
        %v825 = vunpack.c.l.b16 %v558
        %v826 = vunpack.c.l.b16 %v559
        %v827 = vunpack.c.l.b16 %v560
        %v828 = vunpack.c.l.b16 %v561
        %v829 = vunpack.c.l.b16 %v562
        %v830 = vunpack.c.l.b16 %v563
        %v831 = vunpack.c.l.b16 %v564
        %v832 = vunpack.c.l.b16 %v565
        %v833 = vunpack.c.l.b16 %v566
        %v834 = vunpack.c.l.b16 %v567
        %v835 = vunpack.c.l.b16 %v568
        %v836 = vunpack.c.l.b16 %v569
        %v837 = vunpack.c.l.b16 %v570
        %v838 = vunpack.c.l.b16 %v571
        %v839 = vunpack.c.l.b16 %v572
        %v840 = vunpack.c.l.b16 %v573
        %v841 = vunpack.c.l.b16 %v574
        %v842 = vunpack.c.l.b16 %v575
        %v843 = vunpack.c.l.b16 %v576
        %v844 = vpack.c.b16 %v733, %v732
        %v845 = vpack.c.b16 %v735, %v734
        %v846 = vpack.c.b16 %v737, %v736
        %v847 = vpack.c.b16 %v739, %v738
        %v848 = vpack.c.b16 %v741, %v740
        %v849 = vpack.c.b16 %v743, %v742
        %v850 = vpack.c.b16 %v745, %v744
        %v851 = vpack.c.b16 %v747, %v746
        %v852 = vpack.c.b16 %v749, %v748
        %v853 = vpack.c.b16 %v751, %v750
        %v854 = vpack.c.b16 %v753, %v752
        %v855 = vpack.c.b16 %v755, %v754
        %v856 = vpack.c.b16 %v757, %v756
        %v857 = vpack.c.b16 %v759, %v758
        %v858 = vpack.c.b16 %v761, %v760
        %v859 = vpack.c.b16 %v763, %v762
        %v860 = vpack.c.b16 %v765, %v764
        %v861 = vpack.c.b16 %v767, %v766
        %v862 = vpack.c.b16 %v769, %v768
        %v863 = vpack.c.b16 %v771, %v770
        %v864 = vpack.c.b16 %v773, %v772
        %v865 = vpack.c.b16 %v775, %v774
        %v866 = vpack.c.b16 %v777, %v776
        %v867 = vpack.c.b16 %v779, %v778
        %v868 = vpack.c.b16 %v781, %v780
        %v869 = vpack.c.b16 %v783, %v782
        %v870 = vpack.c.b16 %v785, %v784
        %v871 = vpack.c.b16 %v787, %v786
        %v872 = vpack.c.b16 %v789, %v788
        %v873 = vpack.c.b16 %v791, %v790
        %v874 = vpack.c.b16 %v793, %v792
        %v875 = vpack.c.b16 %v795, %v794
        %v876 = vpack.c.b16 %v797, %v796
        %v877 = vpack.c.b16 %v799, %v798
        %v878 = vpack.c.b16 %v801, %v800
        %v879 = vpack.c.b16 %v803, %v802
        %v880 = vpack.c.b16 %v805, %v804
        %v881 = vpack.c.b16 %v807, %v806
        %v882 = vpack.c.b16 %v809, %v808
        %v883 = vpack.c.b16 %v811, %v810
        %v884 = vpack.c.b16 %v813, %v812
        %v885 = vpack.c.b16 %v815, %v814
        %v886 = vpack.c.b16 %v817, %v816
        %v887 = vpack.c.b16 %v819, %v818
        %v888 = vpack.c.b16 %v821, %v820
        %v889 = vpack.c.b16 %v823, %v822
        %v890 = vpack.c.b16 %v825, %v824
        %v891 = vpack.c.b16 %v827, %v826
        %v892 = vpack.c.b16 %v829, %v828
        %v893 = vpack.c.b16 %v831, %v830
        %v894 = vpack.c.b16 %v833, %v832
        %v895 = vpack.c.b16 %v835, %v834
        %v896 = vpack.c.b16 %v837, %v836
        %v897 = vpack.c.b16 %v839, %v838
        %v898 = vpack.c.b16 %v841, %v840
        %v899 = vpack.c.b16 %v843, %v842
        %956 = vmatprep.subr.bf16.mxu0 0
        %957 = vmatpush1.bf16.msra.mxu0 %v851
        %958 = vmatprep.subr.bf16.mxu0 0
        %959 = vmatpush1.bf16.msra.mxu0 %v850
        %960 = vmatprep.subr.bf16.mxu0 0
        %961 = vmatpush1.bf16.msra.mxu0 %v849
        %962 = vmatprep.subr.bf16.mxu0 0
        %963 = vmatpush1.bf16.msra.mxu0 %v848
        %964 = vmatprep.subr.bf16.mxu0 0
        %965 = vmatpush1.bf16.msra.mxu0 %v847
        %966 = vmatprep.subr.bf16.mxu0 0
        %967 = vmatpush1.bf16.msra.mxu0 %v846
        %968 = vmatprep.subr.bf16.mxu0 0
        %969 = vmatpush1.bf16.msra.mxu0 %v845
        %970 = vmatprep.subr.bf16.mxu0 0
        %971 = vmatpush1.bf16.msra.mxu0 %v844
        %972 = vmatprep.subr.bf16.mxu0 0
        %973 = vmatpush2.bf16.msra.mxu0 %v859
        %974 = vmatprep.subr.bf16.mxu0 0
        %975 = vmatpush2.bf16.msra.mxu0 %v858
        %976 = vmatprep.subr.bf16.mxu0 0
        %977 = vmatpush2.bf16.msra.mxu0 %v857
        %978 = vmatprep.subr.bf16.mxu0 0
        %979 = vmatpush2.bf16.msra.mxu0 %v856
        %980 = vmatprep.subr.bf16.mxu0 0
        %981 = vmatpush2.bf16.msra.mxu0 %v855
        %982 = vmatprep.subr.bf16.mxu0 0
        %983 = vmatpush2.bf16.msra.mxu0 %v854
        %984 = vmatprep.subr.bf16.mxu0 0
        %985 = vmatpush2.bf16.msra.mxu0 %v853
        %986 = vmatprep.subr.bf16.mxu0 0
        %987 = vmatpush2.bf16.msra.mxu0 %v852
        %988 = vmatprep.mubr.bf16.mxu0 %v607
        %989 = vmatmul.mubr.bf16.gmra.mxu0 %v606
        %v990 = vpop.f32.mrf.mxu0
        %v991 = vadd.f32 %v582, %v990
        %v992 = vpop.f32.mrf.mxu0
        %v993 = vpop.f32.mrf.mxu0
        %v994 = vadd.f32 %v582, %v993
        %v995 = vpop.f32.mrf.mxu0
        %996 = vdwg.mxu0
        %997 = vmatprep.subr.bf16.mxu0 0
        %998 = vmatpush1.bf16.msra.mxu0 %v867
        %999 = vmatprep.subr.bf16.mxu0 0
        %1000 = vmatpush1.bf16.msra.mxu0 %v866
        %1001 = vmatprep.subr.bf16.mxu0 0
        %1002 = vmatpush1.bf16.msra.mxu0 %v865
        %1003 = vmatprep.subr.bf16.mxu0 0
        %1004 = vmatpush1.bf16.msra.mxu0 %v864
        %1005 = vmatprep.subr.bf16.mxu0 0
        %1006 = vmatpush1.bf16.msra.mxu0 %v863
        %1007 = vmatprep.subr.bf16.mxu0 0
        %1008 = vmatpush1.bf16.msra.mxu0 %v862
        %1009 = vmatprep.subr.bf16.mxu0 0
        %1010 = vmatpush1.bf16.msra.mxu0 %v861
        %1011 = vmatprep.subr.bf16.mxu0 0
        %1012 = vmatpush1.bf16.msra.mxu0 %v860
        %1013 = vmatprep.subr.bf16.mxu0 0
        %1014 = vmatpush2.bf16.msra.mxu0 %v875
        %1015 = vmatprep.subr.bf16.mxu0 0
        %1016 = vmatpush2.bf16.msra.mxu0 %v874
        %1017 = vmatprep.subr.bf16.mxu0 0
        %1018 = vmatpush2.bf16.msra.mxu0 %v873
        %1019 = vmatprep.subr.bf16.mxu0 0
        %1020 = vmatpush2.bf16.msra.mxu0 %v872
        %1021 = vmatprep.subr.bf16.mxu0 0
        %1022 = vmatpush2.bf16.msra.mxu0 %v871
        %1023 = vmatprep.subr.bf16.mxu0 0
        %1024 = vmatpush2.bf16.msra.mxu0 %v870
        %1025 = vmatprep.subr.bf16.mxu0 0
        %1026 = vmatpush2.bf16.msra.mxu0 %v869
        %1027 = vmatprep.subr.bf16.mxu0 0
        %1028 = vmatpush2.bf16.msra.mxu0 %v868
        %1029 = vmatprep.mubr.bf16.mxu0 %v609
        %1030 = vmatmul.mubr.bf16.gmra.mxu0 %v608
        %v1031 = vpop.f32.mrf.mxu0
        %v1032 = vadd.f32 %v991, %v1031
        %v1033 = vpop.f32.mrf.mxu0
        %v1034 = vpop.f32.mrf.mxu0
        %v1035 = vadd.f32 %v994, %v1034
        %v1036 = vpop.f32.mrf.mxu0
        %1037 = vdwg.mxu0
        %1038 = vmatprep.subr.bf16.mxu0 0
        %1039 = vmatpush1.bf16.msra.mxu0 %v883
        %1040 = vmatprep.subr.bf16.mxu0 0
        %1041 = vmatpush1.bf16.msra.mxu0 %v882
        %1042 = vmatprep.subr.bf16.mxu0 0
        %1043 = vmatpush1.bf16.msra.mxu0 %v881
        %1044 = vmatprep.subr.bf16.mxu0 0
        %1045 = vmatpush1.bf16.msra.mxu0 %v880
        %1046 = vmatprep.subr.bf16.mxu0 0
        %1047 = vmatpush1.bf16.msra.mxu0 %v879
        %1048 = vmatprep.subr.bf16.mxu0 0
        %1049 = vmatpush1.bf16.msra.mxu0 %v878
        %1050 = vmatprep.subr.bf16.mxu0 0
        %1051 = vmatpush1.bf16.msra.mxu0 %v877
        %1052 = vmatprep.subr.bf16.mxu0 0
        %1053 = vmatpush1.bf16.msra.mxu0 %v876
        %1054 = vmatprep.subr.bf16.mxu0 0
        %1055 = vmatpush2.bf16.msra.mxu0 %v891
        %1056 = vmatprep.subr.bf16.mxu0 0
        %1057 = vmatpush2.bf16.msra.mxu0 %v890
        %1058 = vmatprep.subr.bf16.mxu0 0
        %1059 = vmatpush2.bf16.msra.mxu0 %v889
        %1060 = vmatprep.subr.bf16.mxu0 0
        %1061 = vmatpush2.bf16.msra.mxu0 %v888
        %1062 = vmatprep.subr.bf16.mxu0 0
        %1063 = vmatpush2.bf16.msra.mxu0 %v887
        %1064 = vmatprep.subr.bf16.mxu0 0
        %1065 = vmatpush2.bf16.msra.mxu0 %v886
        %1066 = vmatprep.subr.bf16.mxu0 0
        %1067 = vmatpush2.bf16.msra.mxu0 %v885
        %1068 = vmatprep.subr.bf16.mxu0 0
        %1069 = vmatpush2.bf16.msra.mxu0 %v884
        %1070 = vmatprep.mubr.bf16.mxu0 %v611
        %1071 = vmatmul.mubr.bf16.gmra.mxu0 %v610
        %v1072 = vpop.f32.mrf.mxu0
        %v1073 = vadd.f32 %v1032, %v1072
        %v1074 = vpop.f32.mrf.mxu0
        %v1075 = vpop.f32.mrf.mxu0
        %v1076 = vadd.f32 %v1035, %v1075
        %v1077 = vpop.f32.mrf.mxu0
        %1078 = vdwg.mxu0
        %1079 = vmatprep.subr.bf16.mxu0 0
        %1080 = vmatpush1.bf16.msra.mxu0 %v899
        %1081 = vmatprep.subr.bf16.mxu0 0
        %1082 = vmatpush1.bf16.msra.mxu0 %v898
        %1083 = vmatprep.subr.bf16.mxu0 0
        %1084 = vmatpush1.bf16.msra.mxu0 %v897
        %1085 = vmatprep.subr.bf16.mxu0 0
        %1086 = vmatpush1.bf16.msra.mxu0 %v896
        %1087 = vmatprep.subr.bf16.mxu0 0
        %1088 = vmatpush1.bf16.msra.mxu0 %v895
        %1089 = vmatprep.subr.bf16.mxu0 0
        %1090 = vmatpush1.bf16.msra.mxu0 %v894
        %1091 = vmatprep.subr.bf16.mxu0 0
        %1092 = vmatpush1.bf16.msra.mxu0 %v893
        %1093 = vmatprep.subr.bf16.mxu0 0
        %1094 = vmatpush1.bf16.msra.mxu0 %v892
        %1095 = vmatprep.subr.bf16.mxu0 0
        %1096 = vmatpush2.bf16.msra.mxu0 0
        %1097 = vmatprep.subr.bf16.mxu0 0
        %1098 = vmatpush2.bf16.msra.mxu0 0
        %1099 = vmatprep.subr.bf16.mxu0 0
        %1100 = vmatpush2.bf16.msra.mxu0 0
        %1101 = vmatprep.subr.bf16.mxu0 0
        %1102 = vmatpush2.bf16.msra.mxu0 0
        %1103 = vmatprep.subr.bf16.mxu0 0
        %1104 = vmatpush2.bf16.msra.mxu0 0
        %1105 = vmatprep.subr.bf16.mxu0 0
        %1106 = vmatpush2.bf16.msra.mxu0 0
        %1107 = vmatprep.subr.bf16.mxu0 0
        %1108 = vmatpush2.bf16.msra.mxu0 0
        %1109 = vmatprep.subr.bf16.mxu0 0
        %1110 = vmatpush2.bf16.msra.mxu0 0
        %1111 = vmatprep.mubr.bf16.mxu0 0
        %1112 = vmatmul.mubr.bf16.gmra.mxu0 %v612
        %v1113 = vpop.f32.mrf.mxu0
        %v1114 = vadd.f32 %v1073, %v1113
        %v1115 = vpop.f32.mrf.mxu0
        %v1116 = vpop.f32.mrf.mxu0
        %v1117 = vadd.f32 %v1076, %v1116
        %v1118 = vpop.f32.mrf.mxu0
        %1119 = vdwg.mxu0
        %v1120 = vmax.f32 %v1114, 0.0
        %v1121 = vmax.f32 %v1117, 0.0
        %v1122 = vpack.c.bf16 %v1121, %v1120
        %v1123 = vld [vmem:[%s3] sm:$0xf]
        %v1124 = vld [vmem:[%s3 + $0x4] sm:$0xf]
        %v1125 = vld [vmem:[%s3 + $0x8] sm:$0xf]
        %v1126 = vld [vmem:[%s3 + $0xc] sm:$0xf]
        %v1127 = vld [vmem:[%s3 + $0x10] sm:$0xf]
        %v1128 = vld [vmem:[%s3 + $0x14] sm:$0xf]
        %v1129 = vld [vmem:[%s3 + $0x18] sm:$0xf]
        %v1130 = vld [vmem:[%s3 + $0x1c] sm:$0xf]
        %v1131 = vld [vmem:[%s3 + $0x20] sm:$0xf]
        %v1132 = vld [vmem:[%s3 + $0x24] sm:$0xf]
        %v1133 = vld [vmem:[%s3 + $0x28] sm:$0xf]
        %v1134 = vld [vmem:[%s3 + $0x2c] sm:$0xf]
        %v1135 = vld [vmem:[%s3 + $0x30] sm:$0xf]
        %v1136 = vld [vmem:[%s3 + $0x34] sm:$0xf]
        %v1137 = vld [vmem:[%s3 + $0x38] sm:$0xf]
        %v1138 = vld [vmem:[%s3 + $0x3c] sm:$0xf]
        %v1139 = vld [vmem:[#allocation7] sm:$0x1]
        %v1141 = vlaneseq
        %v1142 = vshrl.u32 %v1141, 7
        %v1143 = vsub.s32 0, %v1142
        %v1144 = vrot.slane %v1139, %v1143
        %v1162 = vunpack.c.l.b16 %v1123
        %v1163 = vunpack.c.l.b16 %v1124
        %v1164 = vunpack.c.l.b16 %v1125
        %v1165 = vunpack.c.l.b16 %v1126
        %v1166 = vunpack.c.l.b16 %v1127
        %v1167 = vunpack.c.l.b16 %v1128
        %v1168 = vunpack.c.l.b16 %v1129
        %v1169 = vunpack.c.l.b16 %v1130
        %v1170 = vunpack.c.l.b16 %v1131
        %v1171 = vunpack.c.l.b16 %v1132
        %v1172 = vunpack.c.l.b16 %v1133
        %v1173 = vunpack.c.l.b16 %v1134
        %v1174 = vunpack.c.l.b16 %v1135
        %v1175 = vunpack.c.l.b16 %v1136
        %v1176 = vunpack.c.l.b16 %v1137
        %v1177 = vunpack.c.l.b16 %v1138
        %v1178 = vpack.c.b16 %v1163, %v1162
        %v1179 = vpack.c.b16 %v1165, %v1164
        %v1180 = vpack.c.b16 %v1167, %v1166
        %v1181 = vpack.c.b16 %v1169, %v1168
        %v1182 = vpack.c.b16 %v1171, %v1170
        %v1183 = vpack.c.b16 %v1173, %v1172
        %v1184 = vpack.c.b16 %v1175, %v1174
        %v1185 = vpack.c.b16 %v1177, %v1176
        %1194 = vmatprep.subr.bf16.mxu0 0
        %1195 = vmatpush1.bf16.msra.mxu0 %v1185
        %1196 = vmatprep.subr.bf16.mxu0 0
        %1197 = vmatpush1.bf16.msra.mxu0 %v1184
        %1198 = vmatprep.subr.bf16.mxu0 0
        %1199 = vmatpush1.bf16.msra.mxu0 %v1183
        %1200 = vmatprep.subr.bf16.mxu0 0
        %1201 = vmatpush1.bf16.msra.mxu0 %v1182
        %1202 = vmatprep.subr.bf16.mxu0 0
        %1203 = vmatpush1.bf16.msra.mxu0 %v1181
        %1204 = vmatprep.subr.bf16.mxu0 0
        %1205 = vmatpush1.bf16.msra.mxu0 %v1180
        %1206 = vmatprep.subr.bf16.mxu0 0
        %1207 = vmatpush1.bf16.msra.mxu0 %v1179
        %1208 = vmatprep.subr.bf16.mxu0 0
        %1209 = vmatpush1.bf16.msra.mxu0 %v1178
        %1210 = vmatprep.subr.bf16.mxu0 0
        %1211 = vmatpush2.bf16.msra.mxu0 0
        %1212 = vmatprep.subr.bf16.mxu0 0
        %1213 = vmatpush2.bf16.msra.mxu0 0
        %1214 = vmatprep.subr.bf16.mxu0 0
        %1215 = vmatpush2.bf16.msra.mxu0 0
        %1216 = vmatprep.subr.bf16.mxu0 0
        %1217 = vmatpush2.bf16.msra.mxu0 0
        %1218 = vmatprep.subr.bf16.mxu0 0
        %1219 = vmatpush2.bf16.msra.mxu0 0
        %1220 = vmatprep.subr.bf16.mxu0 0
        %1221 = vmatpush2.bf16.msra.mxu0 0
        %1222 = vmatprep.subr.bf16.mxu0 0
        %1223 = vmatpush2.bf16.msra.mxu0 0
        %1224 = vmatprep.subr.bf16.mxu0 0
        %1225 = vmatpush2.bf16.msra.mxu0 0
        %1226 = vmatprep.mubr.bf16.mxu0 0
        %1227 = vmatmul.mubr.bf16.gmra.mxu0 %v1122
        %v1228 = vpop.f32.mrf.mxu0
        %v1229 = vadd.f32 %v1144, %v1228
        %v1230 = vpop.f32.mrf.mxu0
        %v1231 = vpop.f32.mrf.mxu0
        %v1232 = vadd.f32 %v1144, %v1231
        %v1233 = vpop.f32.mrf.mxu0
        %1234 = vdwg.mxu0
        %v1235 = vmax.f32 %v1229, 0.0
        %v1236 = vmax.f32 %v1232, 0.0
        %v1237 = vpack.c.bf16 %v1236, %v1235
        %v1238 = vld [vmem:[%s5] sm:$0xf]
        %v1239 = vld [vmem:[%s5 + $0x4] sm:$0xf]
        %v1240 = vld [vmem:[%s5 + $0x8] sm:$0xf]
        %v1241 = vld [vmem:[%s5 + $0xc] sm:$0xf]
        %v1242 = vld [vmem:[%s5 + $0x10] sm:$0xf]
        %v1243 = vld [vmem:[%s5 + $0x14] sm:$0xf]
        %v1244 = vld [vmem:[%s5 + $0x18] sm:$0xf]
        %v1245 = vld [vmem:[%s5 + $0x1c] sm:$0xf]
        %v1246 = vld [vmem:[#allocation8] sm:$0x1]
        %v1248 = vlaneseq
        %v1249 = vshrl.u32 %v1248, 7
        %v1250 = vsub.s32 0, %v1249
        %v1251 = vrot.slane %v1246, %v1250
        %v1261 = vunpack.c.l.b16 %v1238
        %v1262 = vunpack.c.l.b16 %v1239
        %v1263 = vunpack.c.l.b16 %v1240
        %v1264 = vunpack.c.l.b16 %v1241
        %v1265 = vunpack.c.l.b16 %v1242
        %v1266 = vunpack.c.l.b16 %v1243
        %v1267 = vunpack.c.l.b16 %v1244
        %v1268 = vunpack.c.l.b16 %v1245
        %v1269 = vpack.c.b16 %v1262, %v1261
        %v1270 = vpack.c.b16 %v1264, %v1263
        %v1271 = vpack.c.b16 %v1266, %v1265
        %v1272 = vpack.c.b16 %v1268, %v1267
        %vm1277 = vcmask 523264
        %v1279 = vsel %vm1277, %v1237, 0
        %1281 = vmatprep.subr.bf16.mxu0 0
        %1282 = vmatpush1.bf16.msra.mxu0 0
        %1283 = vmatprep.subr.bf16.mxu0 0
        %1284 = vmatpush1.bf16.msra.mxu0 0
        %1285 = vmatprep.subr.bf16.mxu0 0
        %1286 = vmatpush1.bf16.msra.mxu0 0
        %1287 = vmatprep.subr.bf16.mxu0 0
        %1288 = vmatpush1.bf16.msra.mxu0 0
        %1289 = vmatprep.subr.bf16.mxu0 0
        %1290 = vmatpush1.bf16.msra.mxu0 %v1272
        %1291 = vmatprep.subr.bf16.mxu0 0
        %1292 = vmatpush1.bf16.msra.mxu0 %v1271
        %1293 = vmatprep.subr.bf16.mxu0 0
        %1294 = vmatpush1.bf16.msra.mxu0 %v1270
        %1295 = vmatprep.subr.bf16.mxu0 0
        %1296 = vmatpush1.bf16.msra.mxu0 %v1269
        %1297 = vmatprep.subr.bf16.mxu0 0
        %1298 = vmatpush2.bf16.msra.mxu0 0
        %1299 = vmatprep.subr.bf16.mxu0 0
        %1300 = vmatpush2.bf16.msra.mxu0 0
        %1301 = vmatprep.subr.bf16.mxu0 0
        %1302 = vmatpush2.bf16.msra.mxu0 0
        %1303 = vmatprep.subr.bf16.mxu0 0
        %1304 = vmatpush2.bf16.msra.mxu0 0
        %1305 = vmatprep.subr.bf16.mxu0 0
        %1306 = vmatpush2.bf16.msra.mxu0 0
        %1307 = vmatprep.subr.bf16.mxu0 0
        %1308 = vmatpush2.bf16.msra.mxu0 0
        %1309 = vmatprep.subr.bf16.mxu0 0
        %1310 = vmatpush2.bf16.msra.mxu0 0
        %1311 = vmatprep.subr.bf16.mxu0 0
        %1312 = vmatpush2.bf16.msra.mxu0 0
        %1313 = vmatprep.mubr.bf16.mxu0 0
        %1314 = vmatmul.mubr.bf16.gmra.mxu0 %v1279
        %v1315 = vpop.f32.mrf.mxu0
        %v1316 = vadd.f32 %v1251, %v1315
        %v1317 = vpop.f32.mrf.mxu0
        %v1318 = vpop.f32.mrf.mxu0
        %v1319 = vadd.f32 %v1251, %v1318
        %v1320 = vpop.f32.mrf.mxu0
        %1321 = vdwg.mxu0
        %v1322 = vmax.f32 %v1316, 0.0
        %v1323 = vmax.f32 %v1319, 0.0
        %v1324 = vpack.c.bf16 %v1323, %v1322
        %v1325 = vld [vmem:[%s7] sm:$0xf]
        %v1326 = vld [vmem:[%s7 + $0x4] sm:$0xf]
        %v1327 = vld [vmem:[%s7 + $0x8] sm:$0xf]
        %v1328 = vld [vmem:[%s7 + $0xc] sm:$0xf]
        %v1329 = vld [vmem:[%s7 + $0x10] sm:$0xf]
        %v1330 = vld [vmem:[%s7 + $0x14] sm:$0xf]
        %v1331 = vld [vmem:[%s7 + $0x18] sm:$0xf]
        %v1332 = vld [vmem:[%s7 + $0x1c] sm:$0xf]
        %v1333 = vld [vmem:[#allocation10] sm:$0x1]
        %v1335 = vlaneseq
        %v1336 = vshrl.u32 %v1335, 7
        %v1337 = vsub.s32 0, %v1336
        %v1338 = vrot.slane %v1333, %v1337
        %v1348 = vunpack.c.l.b16 %v1325
        %v1349 = vunpack.c.l.b16 %v1326
        %v1350 = vunpack.c.l.b16 %v1327
        %v1351 = vunpack.c.l.b16 %v1328
        %v1352 = vunpack.c.l.b16 %v1329
        %v1353 = vunpack.c.l.b16 %v1330
        %v1354 = vunpack.c.l.b16 %v1331
        %v1355 = vunpack.c.l.b16 %v1332
        %v1356 = vpack.c.b16 %v1349, %v1348
        %v1357 = vpack.c.b16 %v1351, %v1350
        %v1358 = vpack.c.b16 %v1353, %v1352
        %v1359 = vpack.c.b16 %v1355, %v1354
        %v1365 = vsel %vm1277, %v1324, 0
        %1367 = vmatprep.subr.bf16.mxu0 0
        %1368 = vmatpush1.bf16.msra.mxu0 0
        %1369 = vmatprep.subr.bf16.mxu0 0
        %1370 = vmatpush1.bf16.msra.mxu0 0
        %1371 = vmatprep.subr.bf16.mxu0 0
        %1372 = vmatpush1.bf16.msra.mxu0 0
        %1373 = vmatprep.subr.bf16.mxu0 0
        %1374 = vmatpush1.bf16.msra.mxu0 0
        %1375 = vmatprep.subr.bf16.mxu0 0
        %1376 = vmatpush1.bf16.msra.mxu0 %v1359
        %1377 = vmatprep.subr.bf16.mxu0 0
        %1378 = vmatpush1.bf16.msra.mxu0 %v1358
        %1379 = vmatprep.subr.bf16.mxu0 0
        %1380 = vmatpush1.bf16.msra.mxu0 %v1357
        %1381 = vmatprep.subr.bf16.mxu0 0
        %1382 = vmatpush1.bf16.msra.mxu0 %v1356
        %1383 = vmatprep.subr.bf16.mxu0 0
        %1384 = vmatpush2.bf16.msra.mxu0 0
        %1385 = vmatprep.subr.bf16.mxu0 0
        %1386 = vmatpush2.bf16.msra.mxu0 0
        %1387 = vmatprep.subr.bf16.mxu0 0
        %1388 = vmatpush2.bf16.msra.mxu0 0
        %1389 = vmatprep.subr.bf16.mxu0 0
        %1390 = vmatpush2.bf16.msra.mxu0 0
        %1391 = vmatprep.subr.bf16.mxu0 0
        %1392 = vmatpush2.bf16.msra.mxu0 0
        %1393 = vmatprep.subr.bf16.mxu0 0
        %1394 = vmatpush2.bf16.msra.mxu0 0
        %1395 = vmatprep.subr.bf16.mxu0 0
        %1396 = vmatpush2.bf16.msra.mxu0 0
        %1397 = vmatprep.subr.bf16.mxu0 0
        %1398 = vmatpush2.bf16.msra.mxu0 0
        %1399 = vmatprep.mubr.bf16.mxu0 0
        %1400 = vmatmul.mubr.bf16.gmra.mxu0 %v1365
        %v1401 = vpop.f32.mrf.mxu0
        %v1402 = vadd.f32 %v1338, %v1401
        %v1403 = vpop.f32.mrf.mxu0
        %v1404 = vpop.f32.mrf.mxu0
        %v1405 = vadd.f32 %v1338, %v1404
        %v1406 = vpop.f32.mrf.mxu0
        %1407 = vdwg.mxu0
        %v1408 = vmax.f32 %v1402, 0.0
        %v1409 = vmax.f32 %v1405, 0.0
        %v1410 = vpack.c.bf16 %v1409, %v1408
        %v1411 = vld [vmem:[%s9] sm:$0xf]
        %v1412 = vld [vmem:[%s9 + $0x4] sm:$0xf]
        %v1413 = vld [vmem:[%s9 + $0x8] sm:$0xf]
        %v1414 = vld [vmem:[%s9 + $0xc] sm:$0xf]
        %v1415 = vld [vmem:[%s10] sm:$0x1]
        %v1417 = vlaneseq
        %v1418 = vshrl.u32 %v1417, 7
        %v1419 = vsub.s32 0, %v1418
        %v1420 = vrot.slane %v1415, %v1419
        %v1426 = vunpack.c.l.b16 %v1411
        %v1427 = vunpack.c.l.b16 %v1412
        %v1428 = vunpack.c.l.b16 %v1413
        %v1429 = vunpack.c.l.b16 %v1414
        %v1430 = vpack.c.b16 %v1427, %v1426
        %v1431 = vpack.c.b16 %v1429, %v1428
        %vm1434 = vcmask 261120
        %v1436 = vsel %vm1434, %v1410, 0
        %1438 = vmatprep.subr.bf16.mxu0 0
        %1439 = vmatpush1.bf16.msra.mxu0 0
        %1440 = vmatprep.subr.bf16.mxu0 0
        %1441 = vmatpush1.bf16.msra.mxu0 0
        %1442 = vmatprep.subr.bf16.mxu0 0
        %1443 = vmatpush1.bf16.msra.mxu0 0
        %1444 = vmatprep.subr.bf16.mxu0 0
        %1445 = vmatpush1.bf16.msra.mxu0 0
        %1446 = vmatprep.subr.bf16.mxu0 0
        %1447 = vmatpush1.bf16.msra.mxu0 0
        %1448 = vmatprep.subr.bf16.mxu0 0
        %1449 = vmatpush1.bf16.msra.mxu0 0
        %1450 = vmatprep.subr.bf16.mxu0 0
        %1451 = vmatpush1.bf16.msra.mxu0 %v1431
        %1452 = vmatprep.subr.bf16.mxu0 0
        %1453 = vmatpush1.bf16.msra.mxu0 %v1430
        %1454 = vmatprep.subr.bf16.mxu0 0
        %1455 = vmatpush2.bf16.msra.mxu0 0
        %1456 = vmatprep.subr.bf16.mxu0 0
        %1457 = vmatpush2.bf16.msra.mxu0 0
        %1458 = vmatprep.subr.bf16.mxu0 0
        %1459 = vmatpush2.bf16.msra.mxu0 0
        %1460 = vmatprep.subr.bf16.mxu0 0
        %1461 = vmatpush2.bf16.msra.mxu0 0
        %1462 = vmatprep.subr.bf16.mxu0 0
        %1463 = vmatpush2.bf16.msra.mxu0 0
        %1464 = vmatprep.subr.bf16.mxu0 0
        %1465 = vmatpush2.bf16.msra.mxu0 0
        %1466 = vmatprep.subr.bf16.mxu0 0
        %1467 = vmatpush2.bf16.msra.mxu0 0
        %1468 = vmatprep.subr.bf16.mxu0 0
        %1469 = vmatpush2.bf16.msra.mxu0 0
        %1470 = vmatprep.mubr.bf16.mxu0 0
        %1471 = vmatmul.mubr.bf16.gmra.mxu0 %v1436
        %v1472 = vpop.f32.mrf.mxu0
        %v1473 = vadd.f32 %v1420, %v1472
        %v1474 = vpop.f32.mrf.mxu0
        %v1475 = vpop.f32.mrf.mxu0
        %v1476 = vadd.f32 %v1420, %v1475
        %v1477 = vpop.f32.mrf.mxu0
        %1478 = vdwg.mxu0
        %1479 = vst [vmem:[%s447] sm:$0xff] %v1473
        %1480 = vst [vmem:[%s447 + $0x8] sm:$0xff] %v1476
        %s1481 = sand.u32 %s272, 1
        %s1482 = scalar_lea.sflag [#allocation4], %s1481
        %s1483 = sand.u32 %s272, 1
        %s1484 = smul.addr %s1483, 16
        %s1485 = scalar_lea.vmem [#allocation11], %s1484
        // Predicated region
        $region85: #{tpu_custom_call.1} parent=63 // pred_check
          %p1486 = pneg %p282
        $region86: #{tpu_custom_call.1} parent=63 // pred_check_branch
          %1488 = sbr.rel (%p1486) target = $region88
        $region87: #{tpu_custom_call.1} parent=63 // pred_region
          %s1489 = smul.u32 2, %s28
          %s1491 = ssub.s32 256, 256
          %1492 = vsyncadd %s1482, %s1491
          %s1493 = smul.addr %s1489, 128
          %s1494 = scalar_lea.hbm %s11, %s1493
          %s1495 = sshll.u32 %s1485, 4
          %s1496 = int_to_ptr.vmem [resolvable:$true] %s1495
          %1501 = dma.vmem_to_hbm [thread:$0]  %s1496, 256, %s1494, %s1482, 128, 128, 8
        $region88: #{tpu_custom_call.1} parent=63 // pred_fallthru
          _
      $region64: #{tpu_custom_call.1} parent=5 // pred_fallthru
        _
      %p1502 = scmp.le.s32.totalorder 2, %s23
      // Predicated region
      $region89: #{tpu_custom_call.1} parent=5 // pred_check
        %p1503 = pneg %p1502
      $region90: #{tpu_custom_call.1} parent=5 // pred_check_branch
        %1505 = sbr.rel (%p1503) target = $region92
      $region91: #{tpu_custom_call.1} parent=5 // pred_region
        %s1506 = ssub.s32 %s23, 2
        // Predicated region
        $region93: #{tpu_custom_call.1} parent=91 // pred_check
          %p1507 = pneg %p288
        $region94: #{tpu_custom_call.1} parent=91 // pred_check_branch
          %1509 = sbr.rel (%p1507) target = $region96
        $region95: #{tpu_custom_call.1} parent=91 // pred_region
          %s1510 = sand.u32 %s273, 1
          %s1511 = scalar_lea.sflag [#allocation4], %s1510
          %s1512 = sand.u32 %s273, 1
          %s1513 = smul.addr %s1512, 16
          %s1514 = scalar_lea.vmem [#allocation11], %s1513
          %1515 = dma.done %s1511, 256
        $region96: #{tpu_custom_call.1} parent=91 // pred_fallthru
          _
      $region92: #{tpu_custom_call.1} parent=5 // pred_fallthru
        _
    $region6: #{tpu_custom_call.1} parent=1 // loop_footer
      %s27 = sadd.s32 1, %s23
    $region7: #{tpu_custom_call.1} parent=1 // loop_footer_branch
      %22 = sbr.rel target = $region3
    $region8: #{tpu_custom_call.1} parent=1 // loop_exit
      _
    %1516 = vsyncpa [#allocation3], 1
    %s1517 = scalar_lea.sflag [#allocation3], 1
    %1518 = vsyncpa %s1517, 1
    %1519 = vsyncpa [#allocation6], 1
    %1520 = vsyncpa [#allocation9], 1
    %1521 = vsyncpa [#allocation4], 1
    %s1522 = scalar_lea.sflag [#allocation4], 1
    %1523 = vsyncpa %s1522, 1

// kernel: tpu_custom_call.1
$region0: #{tpu_custom_call.1}
  #allocation0 [shape = 'u32[]', space=smem, size = 0x4, offset = 0x4, fixed_abs, tag = 'smem constant byte address 0x4 - core index']
  #allocation1 [shape = 'u32[144,128]{1,0:T(1,128)}', space=vmem, size = 0x12000, scoped, tag = 'internal scratch']
  %s0 = inlined_call_operand.vmem [shape: bf16[32,896], index: 0, kind: input, shape index: {}]
  %s1 = inlined_call_operand.hbm [shape: bf16[896,128], index: 1, kind: input, shape index: {}]
  %s2 = inlined_call_operand.hbm [shape: f32[1,128], index: 2, kind: input, shape index: {}]
  %s3 = inlined_call_operand.vmem [shape: bf16[128,64], index: 3, kind: input, shape index: {}]
  %s4 = inlined_call_operand.hbm [shape: f32[1,64], index: 4, kind: input, shape index: {}]
  %s5 = inlined_call_operand.vmem [shape: bf16[64,64], index: 5, kind: input, shape index: {}]
  %s6 = inlined_call_operand.hbm [shape: f32[1,64], index: 6, kind: input, shape index: {}]
  %s7 = inlined_call_operand.vmem [shape: bf16[64,32], index: 7, kind: input, shape index: {}]
  %s8 = inlined_call_operand.hbm [shape: f32[1,32], index: 8, kind: input, shape index: {}]
  %s9 = inlined_call_operand.vmem [shape: bf16[32,128], index: 9, kind: input, shape index: {}]
  %s10 = inlined_call_operand.vmem [shape: f32[1,128], index: 10, kind: input, shape index: {}]
  %s11 = inlined_call_operand.hbm [shape: f32[32,128], index: 11, kind: output, shape index: {}]
  %s12 = sld [smem:[#allocation0]]
  $region97: #{tpu_custom_call.1} parent=0
    _
  %s14 = ssub.s32 1, %s12
  %s15 = scalar_select 0, %s14, %s12
  $region1: #{tpu_custom_call.1} parent=0
    #allocation2 [shape = 'u8[229376]{0}', space=vmem, size = 0x38000, scoped, tag = 'input window, operand 1, single buffered']
    #allocation3 [shape = 's32[2]{0}', space=sflag, size = 0x8, scoped, tag = 'scoped memory for tpu_custom_call.1']
    #allocation4 [shape = 's32[2]{0}', space=sflag, size = 0x8, scoped, tag = 'scoped memory for tpu_custom_call.1']
    #allocation5 [shape = 'u8[512]{0}', space=vmem, size = 0x400, scoped, tag = 'input window, operand 2, single buffered']
    #allocation6 [shape = 's32[1]{0}', space=sflag, size = 0x4, scoped, tag = 'scoped memory for tpu_custom_call.1']
    #allocation7 [shape = 'u8[512]{0}', space=vmem, size = 0x400, scoped, tag = 'input window, operand 4, single buffered']
    #allocation8 [shape = 'u8[512]{0}', space=vmem, size = 0x400, scoped, tag = 'input window, operand 6, single buffered']
    #allocation9 [shape = 's32[1]{0}', space=sflag, size = 0x4, scoped, tag = 'scoped memory for tpu_custom_call.1']
    #allocation10 [shape = 'u8[512]{0}', space=vmem, size = 0x400, scoped, tag = 'input window, operand 8, single buffered']
    #allocation11 [shape = 'u8[16384]{0}', space=vmem, size = 0x4000, scoped, tag = 'output window, operand 0']
    %16 = vsyncpa [#allocation3], 0
    %17 = vsyncpa [#allocation6], 0
    %18 = vsyncpa [#allocation9], 0
    %19 = vsyncpa [#allocation4], 0
    %s20 = scalar_lea.sflag [#allocation4], 1
    %21 = vsyncpa %s20, 0
    loop: start=0, step=1, limit=4
    $region2: #{tpu_custom_call.1} parent=1 // loop_pre_header
      _
    $region3: #{tpu_custom_call.1} parent=1 // loop_header
      %s23 = sphi 0, %s27
      %p24 = scmp.ge.s32.totalorder %s23, 4
      %s33 = sphi 0, %s35
      %s36 = sphi 0, %s33
      %s37 = sphi 0, %s36
      %s53 = sphi 0, %s37
      %s57 = sphi 0, %s57
      %s59 = sphi 0, %s57
      %s60 = sphi 0, %s59
      %s74 = sphi 0, %s60
      %s78 = sphi 0, %s78
      %s80 = sphi 0, %s78
      %s81 = sphi 0, %s80
      %s95 = sphi 0, %s81
      %s99 = sphi 0, %s99
      %s101 = sphi 0, %s99
      %s102 = sphi 0, %s101
      %s116 = sphi 0, %s102
      %s120 = sphi 0, %s120
      %s122 = sphi 0, %s120
      %s123 = sphi 0, %s122
      %s137 = sphi 0, %s123
      %s141 = sphi 0, %s141
      %s143 = sphi 0, %s141
      %s144 = sphi 0, %s143
      %s158 = sphi 0, %s144
      %s162 = sphi 0, %s162
      %s164 = sphi 0, %s162
      %s165 = sphi 0, %s164
      %s179 = sphi 0, %s165
      %s183 = sphi 0, %s183
      %s185 = sphi 0, %s183
      %s186 = sphi 0, %s185
      %s200 = sphi 0, %s186
      %s204 = sphi 0, %s204
      %s206 = sphi 0, %s204
      %s207 = sphi 0, %s206
      %s221 = sphi 0, %s207
      %s225 = sphi 0, %s225
      %s227 = sphi 0, %s225
      %s228 = sphi 0, %s227
      %s242 = sphi 0, %s228
      %s246 = sphi 0, %s246
      %s248 = sphi 0, %s246
      %s249 = sphi 0, %s248
      %s263 = sphi 0, %s249
      %s269 = sphi 0, %s271
      %s272 = sphi 0, %s269
      %s273 = sphi 0, %s272
      %s289 = sphi 0, %s273
    $region4: #{tpu_custom_call.1} parent=1 // loop_header_branch
      %26 = sbr.rel (%p24) target = $region8
    $region5: #{tpu_custom_call.1} parent=1 // loop_body
      %s28 = ssub.s32 %s23, 1
      %s29 = ssub.s32 %s23, 2
      %s30 = sadd.s32 %s23, 1
      %s31 = ssub.s32 %s23, %s30
      %p32 = scmp.eq.s32.totalorder %s31, 0
      %s34 = sadd.s32 %s33, 1
      %s35 = scalar_select %p32, %s33, %s34
      %p38 = pneg %p32
      %p39 = scmp.eq.s32.totalorder %s23, 1
      %p40 = por %p38, %p39
      %p41 = scmp.ne.s32.totalorder %s33, %s36
      %p42 = scmp.eq.s32.totalorder %s23, 0
      %p43 = por %p41, %p42
      %p44 = scmp.ne.s32.totalorder %s33, %s36
      %p45 = scmp.eq.s32.totalorder %s28, 1
      %p46 = por %p44, %p45
      %p47 = scmp.ne.s32.totalorder %s36, %s37
      %p48 = scmp.eq.s32.totalorder %s28, 0
      %p49 = por %p47, %p48
      %p50 = scmp.ne.s32.totalorder %s36, %s37
      %p51 = scmp.eq.s32.totalorder %s29, 1
      %p52 = por %p50, %p51
      %p54 = scmp.ne.s32.totalorder %s37, %s53
      %p55 = scmp.eq.s32.totalorder %s29, 0
      %p56 = por %p54, %p55
      %s58 = sadd.s32 %s57, 1
      %p61 = scmp.eq.s32.totalorder %s23, 1
      %p62 = scmp.ne.s32.totalorder %s57, %s59
      %p63 = scmp.eq.s32.totalorder %s23, 0
      %p64 = por %p62, %p63
      %p65 = scmp.ne.s32.totalorder %s57, %s59
      %p66 = scmp.eq.s32.totalorder %s28, 1
      %p67 = por %p65, %p66
      %p68 = scmp.ne.s32.totalorder %s59, %s60
      %p69 = scmp.eq.s32.totalorder %s28, 0
      %p70 = por %p68, %p69
      %p71 = scmp.ne.s32.totalorder %s59, %s60
      %p72 = scmp.eq.s32.totalorder %s29, 1
      %p73 = por %p71, %p72
      %p75 = scmp.ne.s32.totalorder %s60, %s74
      %p76 = scmp.eq.s32.totalorder %s29, 0
      %p77 = por %p75, %p76
      %s79 = sadd.s32 %s78, 1
      %p82 = scmp.eq.s32.totalorder %s23, 1
      %p83 = scmp.ne.s32.totalorder %s78, %s80
      %p84 = scmp.eq.s32.totalorder %s23, 0
      %p85 = por %p83, %p84
      %p86 = scmp.ne.s32.totalorder %s78, %s80
      %p87 = scmp.eq.s32.totalorder %s28, 1
      %p88 = por %p86, %p87
      %p89 = scmp.ne.s32.totalorder %s80, %s81
      %p90 = scmp.eq.s32.totalorder %s28, 0
      %p91 = por %p89, %p90
      %p92 = scmp.ne.s32.totalorder %s80, %s81
      %p93 = scmp.eq.s32.totalorder %s29, 1
      %p94 = por %p92, %p93
      %p96 = scmp.ne.s32.totalorder %s81, %s95
      %p97 = scmp.eq.s32.totalorder %s29, 0
      %p98 = por %p96, %p97
      %s100 = sadd.s32 %s99, 1
      %p103 = scmp.eq.s32.totalorder %s23, 1
      %p104 = scmp.ne.s32.totalorder %s99, %s101
      %p105 = scmp.eq.s32.totalorder %s23, 0
      %p106 = por %p104, %p105
      %p107 = scmp.ne.s32.totalorder %s99, %s101
      %p108 = scmp.eq.s32.totalorder %s28, 1
      %p109 = por %p107, %p108
      %p110 = scmp.ne.s32.totalorder %s101, %s102
      %p111 = scmp.eq.s32.totalorder %s28, 0
      %p112 = por %p110, %p111
      %p113 = scmp.ne.s32.totalorder %s101, %s102
      %p114 = scmp.eq.s32.totalorder %s29, 1
      %p115 = por %p113, %p114
      %p117 = scmp.ne.s32.totalorder %s102, %s116
      %p118 = scmp.eq.s32.totalorder %s29, 0
      %p119 = por %p117, %p118
      %s121 = sadd.s32 %s120, 1
      %p124 = scmp.eq.s32.totalorder %s23, 1
      %p125 = scmp.ne.s32.totalorder %s120, %s122
      %p126 = scmp.eq.s32.totalorder %s23, 0
      %p127 = por %p125, %p126
      %p128 = scmp.ne.s32.totalorder %s120, %s122
      %p129 = scmp.eq.s32.totalorder %s28, 1
      %p130 = por %p128, %p129
      %p131 = scmp.ne.s32.totalorder %s122, %s123
      %p132 = scmp.eq.s32.totalorder %s28, 0
      %p133 = por %p131, %p132
      %p134 = scmp.ne.s32.totalorder %s122, %s123
      %p135 = scmp.eq.s32.totalorder %s29, 1
      %p136 = por %p134, %p135
      %p138 = scmp.ne.s32.totalorder %s123, %s137
      %p139 = scmp.eq.s32.totalorder %s29, 0
      %p140 = por %p138, %p139
      %s142 = sadd.s32 %s141, 1
      %p145 = scmp.eq.s32.totalorder %s23, 1
      %p146 = scmp.ne.s32.totalorder %s141, %s143
      %p147 = scmp.eq.s32.totalorder %s23, 0
      %p148 = por %p146, %p147
      %p149 = scmp.ne.s32.totalorder %s141, %s143
      %p150 = scmp.eq.s32.totalorder %s28, 1
      %p151 = por %p149, %p150
      %p152 = scmp.ne.s32.totalorder %s143, %s144
      %p153 = scmp.eq.s32.totalorder %s28, 0
      %p154 = por %p152, %p153
      %p155 = scmp.ne.s32.totalorder %s143, %s144
      %p156 = scmp.eq.s32.totalorder %s29, 1
      %p157 = por %p155, %p156
      %p159 = scmp.ne.s32.totalorder %s144, %s158
      %p160 = scmp.eq.s32.totalorder %s29, 0
      %p161 = por %p159, %p160
      %s163 = sadd.s32 %s162, 1
      %p166 = scmp.eq.s32.totalorder %s23, 1
      %p167 = scmp.ne.s32.totalorder %s162, %s164
      %p168 = scmp.eq.s32.totalorder %s23, 0
      %p169 = por %p167, %p168
      %p170 = scmp.ne.s32.totalorder %s162, %s164
      %p171 = scmp.eq.s32.totalorder %s28, 1
      %p172 = por %p170, %p171
      %p173 = scmp.ne.s32.totalorder %s164, %s165
      %p174 = scmp.eq.s32.totalorder %s28, 0
      %p175 = por %p173, %p174
      %p176 = scmp.ne.s32.totalorder %s164, %s165
      %p177 = scmp.eq.s32.totalorder %s29, 1
      %p178 = por %p176, %p177
      %p180 = scmp.ne.s32.totalorder %s165, %s179
      %p181 = scmp.eq.s32.totalorder %s29, 0
      %p182 = por %p180, %p181
      %s184 = sadd.s32 %s183, 1
      %p187 = scmp.eq.s32.totalorder %s23, 1
      %p188 = scmp.ne.s32.totalorder %s183, %s185
      %p189 = scmp.eq.s32.totalorder %s23, 0
      %p190 = por %p188, %p189
      %p191 = scmp.ne.s32.totalorder %s183, %s185
      %p192 = scmp.eq.s32.totalorder %s28, 1
      %p193 = por %p191, %p192
      %p194 = scmp.ne.s32.totalorder %s185, %s186
      %p195 = scmp.eq.s32.totalorder %s28, 0
      %p196 = por %p194, %p195
      %p197 = scmp.ne.s32.totalorder %s185, %s186
      %p198 = scmp.eq.s32.totalorder %s29, 1
      %p199 = por %p197, %p198
      %p201 = scmp.ne.s32.totalorder %s186, %s200
      %p202 = scmp.eq.s32.totalorder %s29, 0
      %p203 = por %p201, %p202
      %s205 = sadd.s32 %s204, 1
      %p208 = scmp.eq.s32.totalorder %s23, 1
      %p209 = scmp.ne.s32.totalorder %s204, %s206
      %p210 = scmp.eq.s32.totalorder %s23, 0
      %p211 = por %p209, %p210
      %p212 = scmp.ne.s32.totalorder %s204, %s206
      %p213 = scmp.eq.s32.totalorder %s28, 1
      %p214 = por %p212, %p213
      %p215 = scmp.ne.s32.totalorder %s206, %s207
      %p216 = scmp.eq.s32.totalorder %s28, 0
      %p217 = por %p215, %p216
      %p218 = scmp.ne.s32.totalorder %s206, %s207
      %p219 = scmp.eq.s32.totalorder %s29, 1
      %p220 = por %p218, %p219
      %p222 = scmp.ne.s32.totalorder %s207, %s221
      %p223 = scmp.eq.s32.totalorder %s29, 0
      %p224 = por %p222, %p223
      %s226 = sadd.s32 %s225, 1
      %p229 = scmp.eq.s32.totalorder %s23, 1
      %p230 = scmp.ne.s32.totalorder %s225, %s227
      %p231 = scmp.eq.s32.totalorder %s23, 0
      %p232 = por %p230, %p231
      %p233 = scmp.ne.s32.totalorder %s225, %s227
      %p234 = scmp.eq.s32.totalorder %s28, 1
      %p235 = por %p233, %p234
      %p236 = scmp.ne.s32.totalorder %s227, %s228
      %p237 = scmp.eq.s32.totalorder %s28, 0
      %p238 = por %p236, %p237
      %p239 = scmp.ne.s32.totalorder %s227, %s228
      %p240 = scmp.eq.s32.totalorder %s29, 1
      %p241 = por %p239, %p240
      %p243 = scmp.ne.s32.totalorder %s228, %s242
      %p244 = scmp.eq.s32.totalorder %s29, 0
      %p245 = por %p243, %p244
      %s247 = sadd.s32 %s246, 1
      %p250 = scmp.eq.s32.totalorder %s23, 1
      %p251 = scmp.ne.s32.totalorder %s246, %s248
      %p252 = scmp.eq.s32.totalorder %s23, 0
      %p253 = por %p251, %p252
      %p254 = scmp.ne.s32.totalorder %s246, %s248
      %p255 = scmp.eq.s32.totalorder %s28, 1
      %p256 = por %p254, %p255
      %p257 = scmp.ne.s32.totalorder %s248, %s249
      %p258 = scmp.eq.s32.totalorder %s28, 0
      %p259 = por %p257, %p258
      %p260 = scmp.ne.s32.totalorder %s248, %s249
      %p261 = scmp.eq.s32.totalorder %s29, 1
      %p262 = por %p260, %p261
      %p264 = scmp.ne.s32.totalorder %s249, %s263
      %p265 = scmp.eq.s32.totalorder %s29, 0
      %p266 = por %p264, %p265
      %s267 = ssub.s32 %s23, %s30
      %p268 = scmp.eq.s32.totalorder %s267, 0
      %s270 = sadd.s32 %s269, 1
      %s271 = scalar_select %p268, %s269, %s270
      %p274 = pneg %p268
      %p275 = scmp.eq.s32.totalorder %s23, 1
      %p276 = por %p274, %p275
      %p277 = scmp.ne.s32.totalorder %s269, %s272
      %p278 = scmp.eq.s32.totalorder %s23, 0
      %p279 = por %p277, %p278
      %p280 = scmp.ne.s32.totalorder %s269, %s272
      %p281 = scmp.eq.s32.totalorder %s28, 1
      %p282 = por %p280, %p281
      %p283 = scmp.ne.s32.totalorder %s272, %s273
      %p284 = scmp.eq.s32.totalorder %s28, 0
      %p285 = por %p283, %p284
      %p286 = scmp.ne.s32.totalorder %s272, %s273
      %p287 = scmp.eq.s32.totalorder %s29, 1
      %p288 = por %p286, %p287
      %p290 = scmp.ne.s32.totalorder %s273, %s289
      %p291 = scmp.eq.s32.totalorder %s29, 0
      %p292 = por %p290, %p291
      %p293 = scmp.le.s32.totalorder 1, %s23
      %p294 = scmp.lt.s32.totalorder %s23, 3
      %p295 = pnand %p293, %p294
      %p296 = pneg %p295
      // Predicated region
      $region9: #{tpu_custom_call.1} parent=5 // pred_check
        _
      $region10: #{tpu_custom_call.1} parent=5 // pred_check_branch
        %298 = sbr.rel (%p295) target = $region12
      $region11: #{tpu_custom_call.1} parent=5 // pred_region
        %s299 = ssub.s32 %s23, 1
        // Predicated region
        $region13: #{tpu_custom_call.1} parent=11 // pred_check
          %p300 = pneg %p70
        $region14: #{tpu_custom_call.1} parent=11 // pred_check_branch
          %302 = sbr.rel (%p300) target = $region16
        $region15: #{tpu_custom_call.1} parent=11 // pred_region
          %s304 = ssub.s32 7168, 7168
          %305 = vsyncadd [#allocation3], %s304
          %s306 = sshll.u32 [#allocation2], 4
          %s307 = int_to_ptr.vmem [resolvable:$true] %s306
          %312 = dma.hbm_to_vmem [thread:$0]  %s1, 7168, %s307, [#allocation3], 64, 64, 4
        $region16: #{tpu_custom_call.1} parent=11 // pred_fallthru
          _
        // Predicated region
        $region17: #{tpu_custom_call.1} parent=11 // pred_check
          %p313 = pneg %p91
        $region18: #{tpu_custom_call.1} parent=11 // pred_check_branch
          %315 = sbr.rel (%p313) target = $region20
        $region19: #{tpu_custom_call.1} parent=11 // pred_region
          %s317 = ssub.s32 16, 16
          %318 = vsyncadd [#allocation6], %s317
          %s320 = sshll.u32 [#allocation5], 4
          %s321 = int_to_ptr.vmem [resolvable:$true] %s320
          %323 = dma.hbm_to_vmem [thread:$0]  %s2, 16, %s321, [#allocation6]
        $region20: #{tpu_custom_call.1} parent=11 // pred_fallthru
          _
        // Predicated region
        $region21: #{tpu_custom_call.1} parent=11 // pred_check
          %p324 = pneg %p112
        $region22: #{tpu_custom_call.1} parent=11 // pred_check_branch
          %326 = sbr.rel (%p324) target = $region24
        $region23: #{tpu_custom_call.1} parent=11 // pred_region
          _
        $region24: #{tpu_custom_call.1} parent=11 // pred_fallthru
          _
        // Predicated region
        $region25: #{tpu_custom_call.1} parent=11 // pred_check
          %p327 = pneg %p133
        $region26: #{tpu_custom_call.1} parent=11 // pred_check_branch
          %329 = sbr.rel (%p327) target = $region28
        $region27: #{tpu_custom_call.1} parent=11 // pred_region
          %s331 = ssub.s32 16, 16
          %332 = vsyncadd [#allocation6], %s331
          %s334 = sshll.u32 [#allocation7], 4
          %s335 = int_to_ptr.vmem [resolvable:$true] %s334
          %337 = dma.hbm_to_vmem [thread:$0]  %s4, 16, %s335, [#allocation6]
        $region28: #{tpu_custom_call.1} parent=11 // pred_fallthru
          _
        // Predicated region
        $region29: #{tpu_custom_call.1} parent=11 // pred_check
          %p338 = pneg %p154
        $region30: #{tpu_custom_call.1} parent=11 // pred_check_branch
          %340 = sbr.rel (%p338) target = $region32
        $region31: #{tpu_custom_call.1} parent=11 // pred_region
          _
        $region32: #{tpu_custom_call.1} parent=11 // pred_fallthru
          _
        // Predicated region
        $region33: #{tpu_custom_call.1} parent=11 // pred_check
          %p341 = pneg %p175
        $region34: #{tpu_custom_call.1} parent=11 // pred_check_branch
          %343 = sbr.rel (%p341) target = $region36
        $region35: #{tpu_custom_call.1} parent=11 // pred_region
          %s345 = ssub.s32 16, 16
          %346 = vsyncadd [#allocation9], %s345
          %s348 = sshll.u32 [#allocation8], 4
          %s349 = int_to_ptr.vmem [resolvable:$true] %s348
          %351 = dma.hbm_to_vmem [thread:$0]  %s6, 16, %s349, [#allocation9]
        $region36: #{tpu_custom_call.1} parent=11 // pred_fallthru
          _
        // Predicated region
        $region37: #{tpu_custom_call.1} parent=11 // pred_check
          %p352 = pneg %p196
        $region38: #{tpu_custom_call.1} parent=11 // pred_check_branch
          %354 = sbr.rel (%p352) target = $region40
        $region39: #{tpu_custom_call.1} parent=11 // pred_region
          _
        $region40: #{tpu_custom_call.1} parent=11 // pred_fallthru
          _
        // Predicated region
        $region41: #{tpu_custom_call.1} parent=11 // pred_check
          %p355 = pneg %p217
        $region42: #{tpu_custom_call.1} parent=11 // pred_check_branch
          %357 = sbr.rel (%p355) target = $region44
        $region43: #{tpu_custom_call.1} parent=11 // pred_region
          %s359 = ssub.s32 16, 16
          %360 = vsyncadd [#allocation9], %s359
          %s362 = sshll.u32 [#allocation10], 4
          %s363 = int_to_ptr.vmem [resolvable:$true] %s362
          %365 = dma.hbm_to_vmem [thread:$0]  %s8, 16, %s363, [#allocation9]
        $region44: #{tpu_custom_call.1} parent=11 // pred_fallthru
          _
        // Predicated region
        $region45: #{tpu_custom_call.1} parent=11 // pred_check
          %p366 = pneg %p238
        $region46: #{tpu_custom_call.1} parent=11 // pred_check_branch
          %368 = sbr.rel (%p366) target = $region48
        $region47: #{tpu_custom_call.1} parent=11 // pred_region
          _
        $region48: #{tpu_custom_call.1} parent=11 // pred_fallthru
          _
        // Predicated region
        $region49: #{tpu_custom_call.1} parent=11 // pred_check
          %p369 = pneg %p259
        $region50: #{tpu_custom_call.1} parent=11 // pred_check_branch
          %371 = sbr.rel (%p369) target = $region52
        $region51: #{tpu_custom_call.1} parent=11 // pred_region
          _
        $region52: #{tpu_custom_call.1} parent=11 // pred_fallthru
          _
      $region12: #{tpu_custom_call.1} parent=5 // pred_fallthru
        _
      %p372 = scmp.lt.s32.totalorder %s23, 2
      // Predicated region
      $region53: #{tpu_custom_call.1} parent=5 // pred_check
        %p373 = pneg %p372
      $region54: #{tpu_custom_call.1} parent=5 // pred_check_branch
        %375 = sbr.rel (%p373) target = $region56
      $region55: #{tpu_custom_call.1} parent=5 // pred_region
        // Predicated region
        $region57: #{tpu_custom_call.1} parent=55 // pred_check
          %p376 = pneg %p43
        $region58: #{tpu_custom_call.1} parent=55 // pred_check_branch
          %378 = sbr.rel (%p376) target = $region60
        $region59: #{tpu_custom_call.1} parent=55 // pred_region
          %s379 = smul.u32 2, %s23
          %p380 = scmp.lt.s32.totalorder %s379, 3
          %s381 = scalar_select %p380, %s379, 3
          %s382 = smul.addr %s381, 7
          %s383 = smul.addr %s382, 4
          %s384 = scalar_lea.vmem %s0, %s383
          %s385 = smul.u32 2, %s23
        $region60: #{tpu_custom_call.1} parent=55 // pred_fallthru
          _
      $region56: #{tpu_custom_call.1} parent=5 // pred_fallthru
        _
      %p386 = scmp.le.s32.totalorder 1, %s23
      %p387 = scmp.lt.s32.totalorder %s23, 3
      %p388 = pnand %p386, %p387
      %p389 = pneg %p388
      // Predicated region
      $region61: #{tpu_custom_call.1} parent=5 // pred_check
        _
      $region62: #{tpu_custom_call.1} parent=5 // pred_check_branch
        %391 = sbr.rel (%p388) target = $region64
      $region63: #{tpu_custom_call.1} parent=5 // pred_region
        %s392 = ssub.s32 %s23, 1
        // Predicated region
        $region65: #{tpu_custom_call.1} parent=63 // pred_check
          %p393 = pneg %p70
        $region66: #{tpu_custom_call.1} parent=63 // pred_check_branch
          %395 = sbr.rel (%p393) target = $region68
        $region67: #{tpu_custom_call.1} parent=63 // pred_region
          %396 = dma.done [#allocation3], 7168
        $region68: #{tpu_custom_call.1} parent=63 // pred_fallthru
          _
        // Predicated region
        $region69: #{tpu_custom_call.1} parent=63 // pred_check
          %p397 = pneg %p91
        $region70: #{tpu_custom_call.1} parent=63 // pred_check_branch
          %399 = sbr.rel (%p397) target = $region72
        $region71: #{tpu_custom_call.1} parent=63 // pred_region
          %400 = dma.done [#allocation6], 16
        $region72: #{tpu_custom_call.1} parent=63 // pred_fallthru
          _
        // Predicated region
        $region73: #{tpu_custom_call.1} parent=63 // pred_check
          %p401 = pneg %p133
        $region74: #{tpu_custom_call.1} parent=63 // pred_check_branch
          %403 = sbr.rel (%p401) target = $region76
        $region75: #{tpu_custom_call.1} parent=63 // pred_region
          %404 = dma.done [#allocation6], 16
        $region76: #{tpu_custom_call.1} parent=63 // pred_fallthru
          _
        // Predicated region
        $region77: #{tpu_custom_call.1} parent=63 // pred_check
          %p405 = pneg %p175
        $region78: #{tpu_custom_call.1} parent=63 // pred_check_branch
          %407 = sbr.rel (%p405) target = $region80
        $region79: #{tpu_custom_call.1} parent=63 // pred_region
          %408 = dma.done [#allocation9], 16
        $region80: #{tpu_custom_call.1} parent=63 // pred_fallthru
          _
        // Predicated region
        $region81: #{tpu_custom_call.1} parent=63 // pred_check
          %p409 = pneg %p217
        $region82: #{tpu_custom_call.1} parent=63 // pred_check_branch
          %411 = sbr.rel (%p409) target = $region84
        $region83: #{tpu_custom_call.1} parent=63 // pred_region
          %412 = dma.done [#allocation9], 16
        $region84: #{tpu_custom_call.1} parent=63 // pred_fallthru
          _
        %s413 = smul.u32 2, %s28
        %p414 = scmp.lt.s32.totalorder %s413, 3
        %s415 = scalar_select %p414, %s413, 3
        %s416 = smul.addr %s415, 7
        %s417 = smul.addr %s416, 4
        %s418 = scalar_lea.vmem %s0, %s417
        %p419 = pneg %p49
        %p420 = pneg %p46
        %p421 = pneg %p70
        %p422 = pneg %p67
        %p423 = pneg %p91
        %p424 = pneg %p88
        %p425 = pneg %p112
        %p426 = pneg %p109
        %p427 = pneg %p133
        %p428 = pneg %p130
        %p429 = pneg %p154
        %p430 = pneg %p151
        %p431 = pneg %p175
        %p432 = pneg %p172
        %p433 = pneg %p196
        %p434 = pneg %p193
        %p435 = pneg %p217
        %p436 = pneg %p214
        %p437 = pneg %p238
        %p438 = pneg %p235
        %p439 = pneg %p259
        %p440 = pneg %p256
        %p441 = pneg %p285
        %p442 = pneg %p282
        %s443 = sand.u32 %s272, 1
        %s444 = scalar_lea.sflag [#allocation4], %s443
        %s445 = sand.u32 %s272, 1
        %s446 = smul.addr %s445, 16
        %s447 = scalar_lea.vmem [#allocation11], %s446
        %s448 = smul.u32 2, %s28
        %p449 = scmp.lt.s32.totalorder %s448, 3
        %s450 = scalar_select %p449, %s448, 3
        %s451 = smul.addr %s450, 7
        %s452 = smul.addr %s451, 4
        %s453 = scalar_lea.vmem %s0, %s452
        %s454 = smul.u32 2, %s28
        %s455 = smul.u32 2, %s28
        %v457 = vld [vmem:[%s453] sm:$0xff]
        %v458 = vld [vmem:[%s453 + $0x8] sm:$0xff]
        %v459 = vld [vmem:[%s453 + $0x10] sm:$0xff]
        %v460 = vld [vmem:[%s453 + $0x18] sm:$0xf]
        %v461 = vld [vmem:[%s453 + $0x1c] sm:$0xff]
        %v462 = vld [vmem:[%s453 + $0x24] sm:$0xff]
        %v463 = vld [vmem:[%s453 + $0x2c] sm:$0xff]
        %v464 = vld [vmem:[%s453 + $0x34] sm:$0xf]
        %v465 = vld [vmem:[#allocation2] sm:$0xf]
        %v466 = vld [vmem:[#allocation2 + $0x4] sm:$0xf]
        %v467 = vld [vmem:[#allocation2 + $0x8] sm:$0xf]
        %v468 = vld [vmem:[#allocation2 + $0xc] sm:$0xf]
        %v469 = vld [vmem:[#allocation2 + $0x10] sm:$0xf]
        %v470 = vld [vmem:[#allocation2 + $0x14] sm:$0xf]
        %v471 = vld [vmem:[#allocation2 + $0x18] sm:$0xf]
        %v472 = vld [vmem:[#allocation2 + $0x1c] sm:$0xf]
        %v473 = vld [vmem:[#allocation2 + $0x20] sm:$0xf]
        %v474 = vld [vmem:[#allocation2 + $0x24] sm:$0xf]
        %v475 = vld [vmem:[#allocation2 + $0x28] sm:$0xf]
        %v476 = vld [vmem:[#allocation2 + $0x2c] sm:$0xf]
        %v477 = vld [vmem:[#allocation2 + $0x30] sm:$0xf]
        %v478 = vld [vmem:[#allocation2 + $0x34] sm:$0xf]
        %v479 = vld [vmem:[#allocation2 + $0x38] sm:$0xf]
        %v480 = vld [vmem:[#allocation2 + $0x3c] sm:$0xf]
        %v481 = vld [vmem:[#allocation2 + $0x40] sm:$0xf]
        %v482 = vld [vmem:[#allocation2 + $0x44] sm:$0xf]
        %v483 = vld [vmem:[#allocation2 + $0x48] sm:$0xf]
        %v484 = vld [vmem:[#allocation2 + $0x4c] sm:$0xf]
        %v485 = vld [vmem:[#allocation2 + $0x50] sm:$0xf]
        %v486 = vld [vmem:[#allocation2 + $0x54] sm:$0xf]
        %v487 = vld [vmem:[#allocation2 + $0x58] sm:$0xf]
        %v488 = vld [vmem:[#allocation2 + $0x5c] sm:$0xf]
        %v489 = vld [vmem:[#allocation2 + $0x60] sm:$0xf]
        %v490 = vld [vmem:[#allocation2 + $0x64] sm:$0xf]
        %v491 = vld [vmem:[#allocation2 + $0x68] sm:$0xf]
        %v492 = vld [vmem:[#allocation2 + $0x6c] sm:$0xf]
        %v493 = vld [vmem:[#allocation2 + $0x70] sm:$0xf]
        %v494 = vld [vmem:[#allocation2 + $0x74] sm:$0xf]
        %v495 = vld [vmem:[#allocation2 + $0x78] sm:$0xf]
        %v496 = vld [vmem:[#allocation2 + $0x7c] sm:$0xf]
        %v497 = vld [vmem:[#allocation2 + $0x80] sm:$0xf]
        %v498 = vld [vmem:[#allocation2 + $0x84] sm:$0xf]
        %v499 = vld [vmem:[#allocation2 + $0x88] sm:$0xf]
        %v500 = vld [vmem:[#allocation2 + $0x8c] sm:$0xf]
        %v501 = vld [vmem:[#allocation2 + $0x90] sm:$0xf]
        %v502 = vld [vmem:[#allocation2 + $0x94] sm:$0xf]
        %v503 = vld [vmem:[#allocation2 + $0x98] sm:$0xf]
        %v504 = vld [vmem:[#allocation2 + $0x9c] sm:$0xf]
        %v505 = vld [vmem:[#allocation2 + $0xa0] sm:$0xf]
        %v506 = vld [vmem:[#allocation2 + $0xa4] sm:$0xf]
        %v507 = vld [vmem:[#allocation2 + $0xa8] sm:$0xf]
        %v508 = vld [vmem:[#allocation2 + $0xac] sm:$0xf]
        %v509 = vld [vmem:[#allocation2 + $0xb0] sm:$0xf]
        %v510 = vld [vmem:[#allocation2 + $0xb4] sm:$0xf]
        %v511 = vld [vmem:[#allocation2 + $0xb8] sm:$0xf]
        %v512 = vld [vmem:[#allocation2 + $0xbc] sm:$0xf]
        %v513 = vld [vmem:[#allocation2 + $0xc0] sm:$0xf]
        %v514 = vld [vmem:[#allocation2 + $0xc4] sm:$0xf]
        %v515 = vld [vmem:[#allocation2 + $0xc8] sm:$0xf]
        %v516 = vld [vmem:[#allocation2 + $0xcc] sm:$0xf]
        %v517 = vld [vmem:[#allocation2 + $0xd0] sm:$0xf]
        %v518 = vld [vmem:[#allocation2 + $0xd4] sm:$0xf]
        %v519 = vld [vmem:[#allocation2 + $0xd8] sm:$0xf]
        %v520 = vld [vmem:[#allocation2 + $0xdc] sm:$0xf]
        %v521 = vld [vmem:[#allocation2 + $0xe0] sm:$0xf]
        %v522 = vld [vmem:[#allocation2 + $0xe4] sm:$0xf]
        %v523 = vld [vmem:[#allocation2 + $0xe8] sm:$0xf]
        %v524 = vld [vmem:[#allocation2 + $0xec] sm:$0xf]
        %v525 = vld [vmem:[#allocation2 + $0xf0] sm:$0xf]
        %v526 = vld [vmem:[#allocation2 + $0xf4] sm:$0xf]
        %v527 = vld [vmem:[#allocation2 + $0xf8] sm:$0xf]
        %v528 = vld [vmem:[#allocation2 + $0xfc] sm:$0xf]
        %v529 = vld [vmem:[#allocation2 + $0x100] sm:$0xf]
        %v530 = vld [vmem:[#allocation2 + $0x104] sm:$0xf]
        %v531 = vld [vmem:[#allocation2 + $0x108] sm:$0xf]
        %v532 = vld [vmem:[#allocation2 + $0x10c] sm:$0xf]
        %v533 = vld [vmem:[#allocation2 + $0x110] sm:$0xf]
        %v534 = vld [vmem:[#allocation2 + $0x114] sm:$0xf]
        %v535 = vld [vmem:[#allocation2 + $0x118] sm:$0xf]
        %v536 = vld [vmem:[#allocation2 + $0x11c] sm:$0xf]
        %v537 = vld [vmem:[#allocation2 + $0x120] sm:$0xf]
        %v538 = vld [vmem:[#allocation2 + $0x124] sm:$0xf]
        %v539 = vld [vmem:[#allocation2 + $0x128] sm:$0xf]
        %v540 = vld [vmem:[#allocation2 + $0x12c] sm:$0xf]
        %v541 = vld [vmem:[#allocation2 + $0x130] sm:$0xf]
        %v542 = vld [vmem:[#allocation2 + $0x134] sm:$0xf]
        %v543 = vld [vmem:[#allocation2 + $0x138] sm:$0xf]
        %v544 = vld [vmem:[#allocation2 + $0x13c] sm:$0xf]
        %v545 = vld [vmem:[#allocation2 + $0x140] sm:$0xf]
        %v546 = vld [vmem:[#allocation2 + $0x144] sm:$0xf]
        %v547 = vld [vmem:[#allocation2 + $0x148] sm:$0xf]
        %v548 = vld [vmem:[#allocation2 + $0x14c] sm:$0xf]
        %v549 = vld [vmem:[#allocation2 + $0x150] sm:$0xf]
        %v550 = vld [vmem:[#allocation2 + $0x154] sm:$0xf]
        %v551 = vld [vmem:[#allocation2 + $0x158] sm:$0xf]
        %v552 = vld [vmem:[#allocation2 + $0x15c] sm:$0xf]
        %v553 = vld [vmem:[#allocation2 + $0x160] sm:$0xf]
        %v554 = vld [vmem:[#allocation2 + $0x164] sm:$0xf]
        %v555 = vld [vmem:[#allocation2 + $0x168] sm:$0xf]
        %v556 = vld [vmem:[#allocation2 + $0x16c] sm:$0xf]
        %v557 = vld [vmem:[#allocation2 + $0x170] sm:$0xf]
        %v558 = vld [vmem:[#allocation2 + $0x174] sm:$0xf]
        %v559 = vld [vmem:[#allocation2 + $0x178] sm:$0xf]
        %v560 = vld [vmem:[#allocation2 + $0x17c] sm:$0xf]
        %v561 = vld [vmem:[#allocation2 + $0x180] sm:$0xf]
        %v562 = vld [vmem:[#allocation2 + $0x184] sm:$0xf]
        %v563 = vld [vmem:[#allocation2 + $0x188] sm:$0xf]
        %v564 = vld [vmem:[#allocation2 + $0x18c] sm:$0xf]
        %v565 = vld [vmem:[#allocation2 + $0x190] sm:$0xf]
        %v566 = vld [vmem:[#allocation2 + $0x194] sm:$0xf]
        %v567 = vld [vmem:[#allocation2 + $0x198] sm:$0xf]
        %v568 = vld [vmem:[#allocation2 + $0x19c] sm:$0xf]
        %v569 = vld [vmem:[#allocation2 + $0x1a0] sm:$0xf]
        %v570 = vld [vmem:[#allocation2 + $0x1a4] sm:$0xf]
        %v571 = vld [vmem:[#allocation2 + $0x1a8] sm:$0xf]
        %v572 = vld [vmem:[#allocation2 + $0x1ac] sm:$0xf]
        %v573 = vld [vmem:[#allocation2 + $0x1b0] sm:$0xf]
        %v574 = vld [vmem:[#allocation2 + $0x1b4] sm:$0xf]
        %v575 = vld [vmem:[#allocation2 + $0x1b8] sm:$0xf]
        %v576 = vld [vmem:[#allocation2 + $0x1bc] sm:$0xf]
        %v577 = vld [vmem:[#allocation5] sm:$0x1]
        %v579 = vlaneseq
        %v580 = vshrl.u32 %v579, 7
        %v581 = vsub.s32 0, %v580
        %v582 = vrot.slane %v577, %v581
        %v592 = vunpack.c.l.b16 %v457
        %v593 = vunpack.c.h.b16 %v457
        %v594 = vunpack.c.l.b16 %v458
        %v595 = vunpack.c.h.b16 %v458
        %v596 = vunpack.c.l.b16 %v459
        %v597 = vunpack.c.h.b16 %v459
        %v598 = vunpack.c.l.b16 %v460
        %v599 = vunpack.c.l.b16 %v461
        %v600 = vunpack.c.h.b16 %v461
        %v601 = vunpack.c.l.b16 %v462
        %v602 = vunpack.c.h.b16 %v462
        %v603 = vunpack.c.l.b16 %v463
        %v604 = vunpack.c.h.b16 %v463
        %v605 = vunpack.c.l.b16 %v464
        %v606 = vpack.c.b16 %v599, %v592
        %v607 = vpack.c.b16 %v600, %v593
        %v608 = vpack.c.b16 %v601, %v594
        %v609 = vpack.c.b16 %v602, %v595
        %v610 = vpack.c.b16 %v603, %v596
        %v611 = vpack.c.b16 %v604, %v597
        %v612 = vpack.c.b16 %v605, %v598
        %v732 = vunpack.c.l.b16 %v465
        %v733 = vunpack.c.l.b16 %v466
        %v734 = vunpack.c.l.b16 %v467
        %v735 = vunpack.c.l.b16 %v468
        %v736 = vunpack.c.l.b16 %v469
        %v737 = vunpack.c.l.b16 %v470
        %v738 = vunpack.c.l.b16 %v471
        %v739 = vunpack.c.l.b16 %v472
        %v740 = vunpack.c.l.b16 %v473
        %v741 = vunpack.c.l.b16 %v474
        %v742 = vunpack.c.l.b16 %v475
        %v743 = vunpack.c.l.b16 %v476
        %v744 = vunpack.c.l.b16 %v477
        %v745 = vunpack.c.l.b16 %v478
        %v746 = vunpack.c.l.b16 %v479
        %v747 = vunpack.c.l.b16 %v480
        %v748 = vunpack.c.l.b16 %v481
        %v749 = vunpack.c.l.b16 %v482
        %v750 = vunpack.c.l.b16 %v483
        %v751 = vunpack.c.l.b16 %v484
        %v752 = vunpack.c.l.b16 %v485
        %v753 = vunpack.c.l.b16 %v486
        %v754 = vunpack.c.l.b16 %v487
        %v755 = vunpack.c.l.b16 %v488
        %v756 = vunpack.c.l.b16 %v489
        %v757 = vunpack.c.l.b16 %v490
        %v758 = vunpack.c.l.b16 %v491
        %v759 = vunpack.c.l.b16 %v492
        %v760 = vunpack.c.l.b16 %v493
        %v761 = vunpack.c.l.b16 %v494
        %v762 = vunpack.c.l.b16 %v495
        %v763 = vunpack.c.l.b16 %v496
        %v764 = vunpack.c.l.b16 %v497
        %v765 = vunpack.c.l.b16 %v498
        %v766 = vunpack.c.l.b16 %v499
        %v767 = vunpack.c.l.b16 %v500
        %v768 = vunpack.c.l.b16 %v501
        %v769 = vunpack.c.l.b16 %v502
        %v770 = vunpack.c.l.b16 %v503
        %v771 = vunpack.c.l.b16 %v504
        %v772 = vunpack.c.l.b16 %v505
        %v773 = vunpack.c.l.b16 %v506
        %v774 = vunpack.c.l.b16 %v507
        %v775 = vunpack.c.l.b16 %v508
        %v776 = vunpack.c.l.b16 %v509
        %v777 = vunpack.c.l.b16 %v510
        %v778 = vunpack.c.l.b16 %v511
        %v779 = vunpack.c.l.b16 %v512
        %v780 = vunpack.c.l.b16 %v513
        %v781 = vunpack.c.l.b16 %v514
        %v782 = vunpack.c.l.b16 %v515
        %v783 = vunpack.c.l.b16 %v516
        %v784 = vunpack.c.l.b16 %v517
        %v785 = vunpack.c.l.b16 %v518
        %v786 = vunpack.c.l.b16 %v519
        %v787 = vunpack.c.l.b16 %v520
        %v788 = vunpack.c.l.b16 %v521
        %v789 = vunpack.c.l.b16 %v522
        %v790 = vunpack.c.l.b16 %v523
        %v791 = vunpack.c.l.b16 %v524
        %v792 = vunpack.c.l.b16 %v525
        %v793 = vunpack.c.l.b16 %v526
        %v794 = vunpack.c.l.b16 %v527
        %v795 = vunpack.c.l.b16 %v528
        %v796 = vunpack.c.l.b16 %v529
        %v797 = vunpack.c.l.b16 %v530
        %v798 = vunpack.c.l.b16 %v531
        %v799 = vunpack.c.l.b16 %v532
        %v800 = vunpack.c.l.b16 %v533
        %v801 = vunpack.c.l.b16 %v534
        %v802 = vunpack.c.l.b16 %v535
        %v803 = vunpack.c.l.b16 %v536
        %v804 = vunpack.c.l.b16 %v537
        %v805 = vunpack.c.l.b16 %v538
        %v806 = vunpack.c.l.b16 %v539
        %v807 = vunpack.c.l.b16 %v540
        %v808 = vunpack.c.l.b16 %v541
        %v809 = vunpack.c.l.b16 %v542
        %v810 = vunpack.c.l.b16 %v543
        %v811 = vunpack.c.l.b16 %v544
        %v812 = vunpack.c.l.b16 %v545
        %v813 = vunpack.c.l.b16 %v546
        %v814 = vunpack.c.l.b16 %v547
        %v815 = vunpack.c.l.b16 %v548
        %v816 = vunpack.c.l.b16 %v549
        %v817 = vunpack.c.l.b16 %v550
        %v818 = vunpack.c.l.b16 %v551
        %v819 = vunpack.c.l.b16 %v552
        %v820 = vunpack.c.l.b16 %v553
        %v821 = vunpack.c.l.b16 %v554
        %v822 = vunpack.c.l.b16 %v555
        %v823 = vunpack.c.l.b16 %v556
        %v824 = vunpack.c.l.b16 %v557
        %v825 = vunpack.c.l.b16 %v558
        %v826 = vunpack.c.l.b16 %v559
        %v827 = vunpack.c.l.b16 %v560
        %v828 = vunpack.c.l.b16 %v561
        %v829 = vunpack.c.l.b16 %v562
        %v830 = vunpack.c.l.b16 %v563
        %v831 = vunpack.c.l.b16 %v564
        %v832 = vunpack.c.l.b16 %v565
        %v833 = vunpack.c.l.b16 %v566
        %v834 = vunpack.c.l.b16 %v567
        %v835 = vunpack.c.l.b16 %v568
        %v836 = vunpack.c.l.b16 %v569
        %v837 = vunpack.c.l.b16 %v570
        %v838 = vunpack.c.l.b16 %v571
        %v839 = vunpack.c.l.b16 %v572
        %v840 = vunpack.c.l.b16 %v573
        %v841 = vunpack.c.l.b16 %v574
        %v842 = vunpack.c.l.b16 %v575
        %v843 = vunpack.c.l.b16 %v576
        %v844 = vpack.c.b16 %v733, %v732
        %v845 = vpack.c.b16 %v735, %v734
        %v846 = vpack.c.b16 %v737, %v736
        %v847 = vpack.c.b16 %v739, %v738
        %v848 = vpack.c.b16 %v741, %v740
        %v849 = vpack.c.b16 %v743, %v742
        %v850 = vpack.c.b16 %v745, %v744
        %v851 = vpack.c.b16 %v747, %v746
        %v852 = vpack.c.b16 %v749, %v748
        %v853 = vpack.c.b16 %v751, %v750
        %v854 = vpack.c.b16 %v753, %v752
        %v855 = vpack.c.b16 %v755, %v754
        %v856 = vpack.c.b16 %v757, %v756
        %v857 = vpack.c.b16 %v759, %v758
        %v858 = vpack.c.b16 %v761, %v760
        %v859 = vpack.c.b16 %v763, %v762
        %v860 = vpack.c.b16 %v765, %v764
        %v861 = vpack.c.b16 %v767, %v766
        %v862 = vpack.c.b16 %v769, %v768
        %v863 = vpack.c.b16 %v771, %v770
        %v864 = vpack.c.b16 %v773, %v772
        %v865 = vpack.c.b16 %v775, %v774
        %v866 = vpack.c.b16 %v777, %v776
        %v867 = vpack.c.b16 %v779, %v778
        %v868 = vpack.c.b16 %v781, %v780
        %v869 = vpack.c.b16 %v783, %v782
        %v870 = vpack.c.b16 %v785, %v784
        %v871 = vpack.c.b16 %v787, %v786
        %v872 = vpack.c.b16 %v789, %v788
        %v873 = vpack.c.b16 %v791, %v790
        %v874 = vpack.c.b16 %v793, %v792
        %v875 = vpack.c.b16 %v795, %v794
        %v876 = vpack.c.b16 %v797, %v796
        %v877 = vpack.c.b16 %v799, %v798
        %v878 = vpack.c.b16 %v801, %v800
        %v879 = vpack.c.b16 %v803, %v802
        %v880 = vpack.c.b16 %v805, %v804
        %v881 = vpack.c.b16 %v807, %v806
        %v882 = vpack.c.b16 %v809, %v808
        %v883 = vpack.c.b16 %v811, %v810
        %v884 = vpack.c.b16 %v813, %v812
        %v885 = vpack.c.b16 %v815, %v814
        %v886 = vpack.c.b16 %v817, %v816
        %v887 = vpack.c.b16 %v819, %v818
        %v888 = vpack.c.b16 %v821, %v820
        %v889 = vpack.c.b16 %v823, %v822
        %v890 = vpack.c.b16 %v825, %v824
        %v891 = vpack.c.b16 %v827, %v826
        %v892 = vpack.c.b16 %v829, %v828
        %v893 = vpack.c.b16 %v831, %v830
        %v894 = vpack.c.b16 %v833, %v832
        %v895 = vpack.c.b16 %v835, %v834
        %v896 = vpack.c.b16 %v837, %v836
        %v897 = vpack.c.b16 %v839, %v838
        %v898 = vpack.c.b16 %v841, %v840
        %v899 = vpack.c.b16 %v843, %v842
        %956 = vmatprep.subr.bf16.mxu0 0
        %957 = vmatpush1.bf16.msra.mxu0 %v851
        %958 = vmatprep.subr.bf16.mxu0 0
        %959 = vmatpush1.bf16.msra.mxu0 %v850
        %960 = vmatprep.subr.bf16.mxu0 0
        %961 = vmatpush1.bf16.msra.mxu0 %v849
        %962 = vmatprep.subr.bf16.mxu0 0
        %963 = vmatpush1.bf16.msra.mxu0 %v848
        %964 = vmatprep.subr.bf16.mxu0 0
        %965 = vmatpush1.bf16.msra.mxu0 %v847
        %966 = vmatprep.subr.bf16.mxu0 0
        %967 = vmatpush1.bf16.msra.mxu0 %v846
        %968 = vmatprep.subr.bf16.mxu0 0
        %969 = vmatpush1.bf16.msra.mxu0 %v845
        %970 = vmatprep.subr.bf16.mxu0 0
        %971 = vmatpush1.bf16.msra.mxu0 %v844
        %972 = vmatprep.subr.bf16.mxu0 0
        %973 = vmatpush2.bf16.msra.mxu0 %v859
        %974 = vmatprep.subr.bf16.mxu0 0
        %975 = vmatpush2.bf16.msra.mxu0 %v858
        %976 = vmatprep.subr.bf16.mxu0 0
        %977 = vmatpush2.bf16.msra.mxu0 %v857
        %978 = vmatprep.subr.bf16.mxu0 0
        %979 = vmatpush2.bf16.msra.mxu0 %v856
        %980 = vmatprep.subr.bf16.mxu0 0
        %981 = vmatpush2.bf16.msra.mxu0 %v855
        %982 = vmatprep.subr.bf16.mxu0 0
        %983 = vmatpush2.bf16.msra.mxu0 %v854
        %984 = vmatprep.subr.bf16.mxu0 0
        %985 = vmatpush2.bf16.msra.mxu0 %v853
        %986 = vmatprep.subr.bf16.mxu0 0
        %987 = vmatpush2.bf16.msra.mxu0 %v852
        %988 = vmatprep.mubr.bf16.mxu0 %v607
        %989 = vmatmul.mubr.bf16.gmra.mxu0 %v606
        %v990 = vpop.f32.mrf.mxu0
        %v991 = vadd.f32 %v582, %v990
        %v992 = vpop.f32.mrf.mxu0
        %v993 = vpop.f32.mrf.mxu0
        %v994 = vadd.f32 %v582, %v993
        %v995 = vpop.f32.mrf.mxu0
        %996 = vdwg.mxu0
        %997 = vmatprep.subr.bf16.mxu0 0
        %998 = vmatpush1.bf16.msra.mxu0 %v867
        %999 = vmatprep.subr.bf16.mxu0 0
        %1000 = vmatpush1.bf16.msra.mxu0 %v866
        %1001 = vmatprep.subr.bf16.mxu0 0
        %1002 = vmatpush1.bf16.msra.mxu0 %v865
        %1003 = vmatprep.subr.bf16.mxu0 0
        %1004 = vmatpush1.bf16.msra.mxu0 %v864
        %1005 = vmatprep.subr.bf16.mxu0 0
        %1006 = vmatpush1.bf16.msra.mxu0 %v863
        %1007 = vmatprep.subr.bf16.mxu0 0
        %1008 = vmatpush1.bf16.msra.mxu0 %v862
        %1009 = vmatprep.subr.bf16.mxu0 0
        %1010 = vmatpush1.bf16.msra.mxu0 %v861
        %1011 = vmatprep.subr.bf16.mxu0 0
        %1012 = vmatpush1.bf16.msra.mxu0 %v860
        %1013 = vmatprep.subr.bf16.mxu0 0
        %1014 = vmatpush2.bf16.msra.mxu0 %v875
        %1015 = vmatprep.subr.bf16.mxu0 0
        %1016 = vmatpush2.bf16.msra.mxu0 %v874
        %1017 = vmatprep.subr.bf16.mxu0 0
        %1018 = vmatpush2.bf16.msra.mxu0 %v873
        %1019 = vmatprep.subr.bf16.mxu0 0
        %1020 = vmatpush2.bf16.msra.mxu0 %v872
        %1021 = vmatprep.subr.bf16.mxu0 0
        %1022 = vmatpush2.bf16.msra.mxu0 %v871
        %1023 = vmatprep.subr.bf16.mxu0 0
        %1024 = vmatpush2.bf16.msra.mxu0 %v870
        %1025 = vmatprep.subr.bf16.mxu0 0
        %1026 = vmatpush2.bf16.msra.mxu0 %v869
        %1027 = vmatprep.subr.bf16.mxu0 0
        %1028 = vmatpush2.bf16.msra.mxu0 %v868
        %1029 = vmatprep.mubr.bf16.mxu0 %v609
        %1030 = vmatmul.mubr.bf16.gmra.mxu0 %v608
        %v1031 = vpop.f32.mrf.mxu0
        %v1032 = vadd.f32 %v991, %v1031
        %v1033 = vpop.f32.mrf.mxu0
        %v1034 = vpop.f32.mrf.mxu0
        %v1035 = vadd.f32 %v994, %v1034
        %v1036 = vpop.f32.mrf.mxu0
        %1037 = vdwg.mxu0
        %1038 = vmatprep.subr.bf16.mxu0 0
        %1039 = vmatpush1.bf16.msra.mxu0 %v883
        %1040 = vmatprep.subr.bf16.mxu0 0
        %1041 = vmatpush1.bf16.msra.mxu0 %v882
        %1042 = vmatprep.subr.bf16.mxu0 0
        %1043 = vmatpush1.bf16.msra.mxu0 %v881
        %1044 = vmatprep.subr.bf16.mxu0 0
        %1045 = vmatpush1.bf16.msra.mxu0 %v880
        %1046 = vmatprep.subr.bf16.mxu0 0
        %1047 = vmatpush1.bf16.msra.mxu0 %v879
        %1048 = vmatprep.subr.bf16.mxu0 0
        %1049 = vmatpush1.bf16.msra.mxu0 %v878
        %1050 = vmatprep.subr.bf16.mxu0 0
        %1051 = vmatpush1.bf16.msra.mxu0 %v877
        %1052 = vmatprep.subr.bf16.mxu0 0
        %1053 = vmatpush1.bf16.msra.mxu0 %v876
        %1054 = vmatprep.subr.bf16.mxu0 0
        %1055 = vmatpush2.bf16.msra.mxu0 %v891
        %1056 = vmatprep.subr.bf16.mxu0 0
        %1057 = vmatpush2.bf16.msra.mxu0 %v890
        %1058 = vmatprep.subr.bf16.mxu0 0
        %1059 = vmatpush2.bf16.msra.mxu0 %v889
        %1060 = vmatprep.subr.bf16.mxu0 0
        %1061 = vmatpush2.bf16.msra.mxu0 %v888
        %1062 = vmatprep.subr.bf16.mxu0 0
        %1063 = vmatpush2.bf16.msra.mxu0 %v887
        %1064 = vmatprep.subr.bf16.mxu0 0
        %1065 = vmatpush2.bf16.msra.mxu0 %v886
        %1066 = vmatprep.subr.bf16.mxu0 0
        %1067 = vmatpush2.bf16.msra.mxu0 %v885
        %1068 = vmatprep.subr.bf16.mxu0 0
        %1069 = vmatpush2.bf16.msra.mxu0 %v884
        %1070 = vmatprep.mubr.bf16.mxu0 %v611
        %1071 = vmatmul.mubr.bf16.gmra.mxu0 %v610
        %v1072 = vpop.f32.mrf.mxu0
        %v1073 = vadd.f32 %v1032, %v1072
        %v1074 = vpop.f32.mrf.mxu0
        %v1075 = vpop.f32.mrf.mxu0
        %v1076 = vadd.f32 %v1035, %v1075
        %v1077 = vpop.f32.mrf.mxu0
        %1078 = vdwg.mxu0
        %1079 = vmatprep.subr.bf16.mxu0 0
        %1080 = vmatpush1.bf16.msra.mxu0 %v899
        %1081 = vmatprep.subr.bf16.mxu0 0
        %1082 = vmatpush1.bf16.msra.mxu0 %v898
        %1083 = vmatprep.subr.bf16.mxu0 0
        %1084 = vmatpush1.bf16.msra.mxu0 %v897
        %1085 = vmatprep.subr.bf16.mxu0 0
        %1086 = vmatpush1.bf16.msra.mxu0 %v896
        %1087 = vmatprep.subr.bf16.mxu0 0
        %1088 = vmatpush1.bf16.msra.mxu0 %v895
        %1089 = vmatprep.subr.bf16.mxu0 0
        %1090 = vmatpush1.bf16.msra.mxu0 %v894
        %1091 = vmatprep.subr.bf16.mxu0 0
        %1092 = vmatpush1.bf16.msra.mxu0 %v893
        %1093 = vmatprep.subr.bf16.mxu0 0
        %1094 = vmatpush1.bf16.msra.mxu0 %v892
        %1095 = vmatprep.subr.bf16.mxu0 0
        %1096 = vmatpush2.bf16.msra.mxu0 0
        %1097 = vmatprep.subr.bf16.mxu0 0
        %1098 = vmatpush2.bf16.msra.mxu0 0
        %1099 = vmatprep.subr.bf16.mxu0 0
        %1100 = vmatpush2.bf16.msra.mxu0 0
        %1101 = vmatprep.subr.bf16.mxu0 0
        %1102 = vmatpush2.bf16.msra.mxu0 0
        %1103 = vmatprep.subr.bf16.mxu0 0
        %1104 = vmatpush2.bf16.msra.mxu0 0
        %1105 = vmatprep.subr.bf16.mxu0 0
        %1106 = vmatpush2.bf16.msra.mxu0 0
        %1107 = vmatprep.subr.bf16.mxu0 0
        %1108 = vmatpush2.bf16.msra.mxu0 0
        %1109 = vmatprep.subr.bf16.mxu0 0
        %1110 = vmatpush2.bf16.msra.mxu0 0
        %1111 = vmatprep.mubr.bf16.mxu0 0
        %1112 = vmatmul.mubr.bf16.gmra.mxu0 %v612
        %v1113 = vpop.f32.mrf.mxu0
        %v1114 = vadd.f32 %v1073, %v1113
        %v1115 = vpop.f32.mrf.mxu0
        %v1116 = vpop.f32.mrf.mxu0
        %v1117 = vadd.f32 %v1076, %v1116
        %v1118 = vpop.f32.mrf.mxu0
        %1119 = vdwg.mxu0
        %v1120 = vmax.f32 %v1114, 0.0
        %v1121 = vmax.f32 %v1117, 0.0
        %v1122 = vpack.c.bf16 %v1121, %v1120
        %v1123 = vld [vmem:[%s3] sm:$0xf]
        %v1124 = vld [vmem:[%s3 + $0x4] sm:$0xf]
        %v1125 = vld [vmem:[%s3 + $0x8] sm:$0xf]
        %v1126 = vld [vmem:[%s3 + $0xc] sm:$0xf]
        %v1127 = vld [vmem:[%s3 + $0x10] sm:$0xf]
        %v1128 = vld [vmem:[%s3 + $0x14] sm:$0xf]
        %v1129 = vld [vmem:[%s3 + $0x18] sm:$0xf]
        %v1130 = vld [vmem:[%s3 + $0x1c] sm:$0xf]
        %v1131 = vld [vmem:[%s3 + $0x20] sm:$0xf]
        %v1132 = vld [vmem:[%s3 + $0x24] sm:$0xf]
        %v1133 = vld [vmem:[%s3 + $0x28] sm:$0xf]
        %v1134 = vld [vmem:[%s3 + $0x2c] sm:$0xf]
        %v1135 = vld [vmem:[%s3 + $0x30] sm:$0xf]
        %v1136 = vld [vmem:[%s3 + $0x34] sm:$0xf]
        %v1137 = vld [vmem:[%s3 + $0x38] sm:$0xf]
        %v1138 = vld [vmem:[%s3 + $0x3c] sm:$0xf]
        %v1139 = vld [vmem:[#allocation7] sm:$0x1]
        %v1141 = vlaneseq
        %v1142 = vshrl.u32 %v1141, 7
        %v1143 = vsub.s32 0, %v1142
        %v1144 = vrot.slane %v1139, %v1143
        %v1162 = vunpack.c.l.b16 %v1123
        %v1163 = vunpack.c.l.b16 %v1124
        %v1164 = vunpack.c.l.b16 %v1125
        %v1165 = vunpack.c.l.b16 %v1126
        %v1166 = vunpack.c.l.b16 %v1127
        %v1167 = vunpack.c.l.b16 %v1128
        %v1168 = vunpack.c.l.b16 %v1129
        %v1169 = vunpack.c.l.b16 %v1130
        %v1170 = vunpack.c.l.b16 %v1131
        %v1171 = vunpack.c.l.b16 %v1132
        %v1172 = vunpack.c.l.b16 %v1133
        %v1173 = vunpack.c.l.b16 %v1134
        %v1174 = vunpack.c.l.b16 %v1135
        %v1175 = vunpack.c.l.b16 %v1136
        %v1176 = vunpack.c.l.b16 %v1137
        %v1177 = vunpack.c.l.b16 %v1138
        %v1178 = vpack.c.b16 %v1163, %v1162
        %v1179 = vpack.c.b16 %v1165, %v1164
        %v1180 = vpack.c.b16 %v1167, %v1166
        %v1181 = vpack.c.b16 %v1169, %v1168
        %v1182 = vpack.c.b16 %v1171, %v1170
        %v1183 = vpack.c.b16 %v1173, %v1172
        %v1184 = vpack.c.b16 %v1175, %v1174
        %v1185 = vpack.c.b16 %v1177, %v1176
        %1194 = vmatprep.subr.bf16.mxu0 0
        %1195 = vmatpush1.bf16.msra.mxu0 %v1185
        %1196 = vmatprep.subr.bf16.mxu0 0
        %1197 = vmatpush1.bf16.msra.mxu0 %v1184
        %1198 = vmatprep.subr.bf16.mxu0 0
        %1199 = vmatpush1.bf16.msra.mxu0 %v1183
        %1200 = vmatprep.subr.bf16.mxu0 0
        %1201 = vmatpush1.bf16.msra.mxu0 %v1182
        %1202 = vmatprep.subr.bf16.mxu0 0
        %1203 = vmatpush1.bf16.msra.mxu0 %v1181
        %1204 = vmatprep.subr.bf16.mxu0 0
        %1205 = vmatpush1.bf16.msra.mxu0 %v1180
        %1206 = vmatprep.subr.bf16.mxu0 0
        %1207 = vmatpush1.bf16.msra.mxu0 %v1179
        %1208 = vmatprep.subr.bf16.mxu0 0
        %1209 = vmatpush1.bf16.msra.mxu0 %v1178
        %1210 = vmatprep.subr.bf16.mxu0 0
        %1211 = vmatpush2.bf16.msra.mxu0 0
        %1212 = vmatprep.subr.bf16.mxu0 0
        %1213 = vmatpush2.bf16.msra.mxu0 0
        %1214 = vmatprep.subr.bf16.mxu0 0
        %1215 = vmatpush2.bf16.msra.mxu0 0
        %1216 = vmatprep.subr.bf16.mxu0 0
        %1217 = vmatpush2.bf16.msra.mxu0 0
        %1218 = vmatprep.subr.bf16.mxu0 0
        %1219 = vmatpush2.bf16.msra.mxu0 0
        %1220 = vmatprep.subr.bf16.mxu0 0
        %1221 = vmatpush2.bf16.msra.mxu0 0
        %1222 = vmatprep.subr.bf16.mxu0 0
        %1223 = vmatpush2.bf16.msra.mxu0 0
        %1224 = vmatprep.subr.bf16.mxu0 0
        %1225 = vmatpush2.bf16.msra.mxu0 0
        %1226 = vmatprep.mubr.bf16.mxu0 0
        %1227 = vmatmul.mubr.bf16.gmra.mxu0 %v1122
        %v1228 = vpop.f32.mrf.mxu0
        %v1229 = vadd.f32 %v1144, %v1228
        %v1230 = vpop.f32.mrf.mxu0
        %v1231 = vpop.f32.mrf.mxu0
        %v1232 = vadd.f32 %v1144, %v1231
        %v1233 = vpop.f32.mrf.mxu0
        %1234 = vdwg.mxu0
        %v1235 = vmax.f32 %v1229, 0.0
        %v1236 = vmax.f32 %v1232, 0.0
        %v1237 = vpack.c.bf16 %v1236, %v1235
        %v1238 = vld [vmem:[%s5] sm:$0xf]
        %v1239 = vld [vmem:[%s5 + $0x4] sm:$0xf]
        %v1240 = vld [vmem:[%s5 + $0x8] sm:$0xf]
        %v1241 = vld [vmem:[%s5 + $0xc] sm:$0xf]
        %v1242 = vld [vmem:[%s5 + $0x10] sm:$0xf]
        %v1243 = vld [vmem:[%s5 + $0x14] sm:$0xf]
        %v1244 = vld [vmem:[%s5 + $0x18] sm:$0xf]
        %v1245 = vld [vmem:[%s5 + $0x1c] sm:$0xf]
        %v1246 = vld [vmem:[#allocation8] sm:$0x1]
        %v1248 = vlaneseq
        %v1249 = vshrl.u32 %v1248, 7
        %v1250 = vsub.s32 0, %v1249
        %v1251 = vrot.slane %v1246, %v1250
        %v1261 = vunpack.c.l.b16 %v1238
        %v1262 = vunpack.c.l.b16 %v1239
        %v1263 = vunpack.c.l.b16 %v1240
        %v1264 = vunpack.c.l.b16 %v1241
        %v1265 = vunpack.c.l.b16 %v1242
        %v1266 = vunpack.c.l.b16 %v1243
        %v1267 = vunpack.c.l.b16 %v1244
        %v1268 = vunpack.c.l.b16 %v1245
        %v1269 = vpack.c.b16 %v1262, %v1261
        %v1270 = vpack.c.b16 %v1264, %v1263
        %v1271 = vpack.c.b16 %v1266, %v1265
        %v1272 = vpack.c.b16 %v1268, %v1267
        %vm1277 = vcmask 523264
        %v1279 = vsel %vm1277, %v1237, 0
        %1281 = vmatprep.subr.bf16.mxu0 0
        %1282 = vmatpush1.bf16.msra.mxu0 0
        %1283 = vmatprep.subr.bf16.mxu0 0
        %1284 = vmatpush1.bf16.msra.mxu0 0
        %1285 = vmatprep.subr.bf16.mxu0 0
        %1286 = vmatpush1.bf16.msra.mxu0 0
        %1287 = vmatprep.subr.bf16.mxu0 0
        %1288 = vmatpush1.bf16.msra.mxu0 0
        %1289 = vmatprep.subr.bf16.mxu0 0
        %1290 = vmatpush1.bf16.msra.mxu0 %v1272
        %1291 = vmatprep.subr.bf16.mxu0 0
        %1292 = vmatpush1.bf16.msra.mxu0 %v1271
        %1293 = vmatprep.subr.bf16.mxu0 0
        %1294 = vmatpush1.bf16.msra.mxu0 %v1270
        %1295 = vmatprep.subr.bf16.mxu0 0
        %1296 = vmatpush1.bf16.msra.mxu0 %v1269
        %1297 = vmatprep.subr.bf16.mxu0 0
        %1298 = vmatpush2.bf16.msra.mxu0 0
        %1299 = vmatprep.subr.bf16.mxu0 0
        %1300 = vmatpush2.bf16.msra.mxu0 0
        %1301 = vmatprep.subr.bf16.mxu0 0
        %1302 = vmatpush2.bf16.msra.mxu0 0
        %1303 = vmatprep.subr.bf16.mxu0 0
        %1304 = vmatpush2.bf16.msra.mxu0 0
        %1305 = vmatprep.subr.bf16.mxu0 0
        %1306 = vmatpush2.bf16.msra.mxu0 0
        %1307 = vmatprep.subr.bf16.mxu0 0
        %1308 = vmatpush2.bf16.msra.mxu0 0
        %1309 = vmatprep.subr.bf16.mxu0 0
        %1310 = vmatpush2.bf16.msra.mxu0 0
        %1311 = vmatprep.subr.bf16.mxu0 0
        %1312 = vmatpush2.bf16.msra.mxu0 0
        %1313 = vmatprep.mubr.bf16.mxu0 0
        %1314 = vmatmul.mubr.bf16.gmra.mxu0 %v1279
        %v1315 = vpop.f32.mrf.mxu0
        %v1316 = vadd.f32 %v1251, %v1315
        %v1317 = vpop.f32.mrf.mxu0
        %v1318 = vpop.f32.mrf.mxu0
        %v1319 = vadd.f32 %v1251, %v1318
        %v1320 = vpop.f32.mrf.mxu0
        %1321 = vdwg.mxu0
        %v1322 = vmax.f32 %v1316, 0.0
        %v1323 = vmax.f32 %v1319, 0.0
        %v1324 = vpack.c.bf16 %v1323, %v1322
        %v1325 = vld [vmem:[%s7] sm:$0xf]
        %v1326 = vld [vmem:[%s7 + $0x4] sm:$0xf]
        %v1327 = vld [vmem:[%s7 + $0x8] sm:$0xf]
        %v1328 = vld [vmem:[%s7 + $0xc] sm:$0xf]
        %v1329 = vld [vmem:[%s7 + $0x10] sm:$0xf]
        %v1330 = vld [vmem:[%s7 + $0x14] sm:$0xf]
        %v1331 = vld [vmem:[%s7 + $0x18] sm:$0xf]
        %v1332 = vld [vmem:[%s7 + $0x1c] sm:$0xf]
        %v1333 = vld [vmem:[#allocation10] sm:$0x1]
        %v1335 = vlaneseq
        %v1336 = vshrl.u32 %v1335, 7
        %v1337 = vsub.s32 0, %v1336
        %v1338 = vrot.slane %v1333, %v1337
        %v1348 = vunpack.c.l.b16 %v1325
        %v1349 = vunpack.c.l.b16 %v1326
        %v1350 = vunpack.c.l.b16 %v1327
        %v1351 = vunpack.c.l.b16 %v1328
        %v1352 = vunpack.c.l.b16 %v1329
        %v1353 = vunpack.c.l.b16 %v1330
        %v1354 = vunpack.c.l.b16 %v1331
        %v1355 = vunpack.c.l.b16 %v1332
        %v1356 = vpack.c.b16 %v1349, %v1348
        %v1357 = vpack.c.b16 %v1351, %v1350
        %v1358 = vpack.c.b16 %v1353, %v1352
        %v1359 = vpack.c.b16 %v1355, %v1354
        %v1365 = vsel %vm1277, %v1324, 0
        %1367 = vmatprep.subr.bf16.mxu0 0
        %1368 = vmatpush1.bf16.msra.mxu0 0
        %1369 = vmatprep.subr.bf16.mxu0 0
        %1370 = vmatpush1.bf16.msra.mxu0 0
        %1371 = vmatprep.subr.bf16.mxu0 0
        %1372 = vmatpush1.bf16.msra.mxu0 0
        %1373 = vmatprep.subr.bf16.mxu0 0
        %1374 = vmatpush1.bf16.msra.mxu0 0
        %1375 = vmatprep.subr.bf16.mxu0 0
        %1376 = vmatpush1.bf16.msra.mxu0 %v1359
        %1377 = vmatprep.subr.bf16.mxu0 0
        %1378 = vmatpush1.bf16.msra.mxu0 %v1358
        %1379 = vmatprep.subr.bf16.mxu0 0
        %1380 = vmatpush1.bf16.msra.mxu0 %v1357
        %1381 = vmatprep.subr.bf16.mxu0 0
        %1382 = vmatpush1.bf16.msra.mxu0 %v1356
        %1383 = vmatprep.subr.bf16.mxu0 0
        %1384 = vmatpush2.bf16.msra.mxu0 0
        %1385 = vmatprep.subr.bf16.mxu0 0
        %1386 = vmatpush2.bf16.msra.mxu0 0
        %1387 = vmatprep.subr.bf16.mxu0 0
        %1388 = vmatpush2.bf16.msra.mxu0 0
        %1389 = vmatprep.subr.bf16.mxu0 0
        %1390 = vmatpush2.bf16.msra.mxu0 0
        %1391 = vmatprep.subr.bf16.mxu0 0
        %1392 = vmatpush2.bf16.msra.mxu0 0
        %1393 = vmatprep.subr.bf16.mxu0 0
        %1394 = vmatpush2.bf16.msra.mxu0 0
        %1395 = vmatprep.subr.bf16.mxu0 0
        %1396 = vmatpush2.bf16.msra.mxu0 0
        %1397 = vmatprep.subr.bf16.mxu0 0
        %1398 = vmatpush2.bf16.msra.mxu0 0
        %1399 = vmatprep.mubr.bf16.mxu0 0
        %1400 = vmatmul.mubr.bf16.gmra.mxu0 %v1365
        %v1401 = vpop.f32.mrf.mxu0
        %v1402 = vadd.f32 %v1338, %v1401
        %v1403 = vpop.f32.mrf.mxu0
        %v1404 = vpop.f32.mrf.mxu0
        %v1405 = vadd.f32 %v1338, %v1404
        %v1406 = vpop.f32.mrf.mxu0
        %1407 = vdwg.mxu0
        %v1408 = vmax.f32 %v1402, 0.0
        %v1409 = vmax.f32 %v1405, 0.0
        %v1410 = vpack.c.bf16 %v1409, %v1408
        %v1411 = vld [vmem:[%s9] sm:$0xf]
        %v1412 = vld [vmem:[%s9 + $0x4] sm:$0xf]
        %v1413 = vld [vmem:[%s9 + $0x8] sm:$0xf]
        %v1414 = vld [vmem:[%s9 + $0xc] sm:$0xf]
        %v1415 = vld [vmem:[%s10] sm:$0x1]
        %v1417 = vlaneseq
        %v1418 = vshrl.u32 %v1417, 7
        %v1419 = vsub.s32 0, %v1418
        %v1420 = vrot.slane %v1415, %v1419
        %v1426 = vunpack.c.l.b16 %v1411
        %v1427 = vunpack.c.l.b16 %v1412
        %v1428 = vunpack.c.l.b16 %v1413
        %v1429 = vunpack.c.l.b16 %v1414
        %v1430 = vpack.c.b16 %v1427, %v1426
        %v1431 = vpack.c.b16 %v1429, %v1428
        %vm1434 = vcmask 261120
        %v1436 = vsel %vm1434, %v1410, 0
        %1438 = vmatprep.subr.bf16.mxu0 0
        %1439 = vmatpush1.bf16.msra.mxu0 0
        %1440 = vmatprep.subr.bf16.mxu0 0
        %1441 = vmatpush1.bf16.msra.mxu0 0
        %1442 = vmatprep.subr.bf16.mxu0 0
        %1443 = vmatpush1.bf16.msra.mxu0 0
        %1444 = vmatprep.subr.bf16.mxu0 0
        %1445 = vmatpush1.bf16.msra.mxu0 0
        %1446 = vmatprep.subr.bf16.mxu0 0
        %1447 = vmatpush1.bf16.msra.mxu0 0
        %1448 = vmatprep.subr.bf16.mxu0 0
        %1449 = vmatpush1.bf16.msra.mxu0 0
        %1450 = vmatprep.subr.bf16.mxu0 0
        %1451 = vmatpush1.bf16.msra.mxu0 %v1431
        %1452 = vmatprep.subr.bf16.mxu0 0
        %1453 = vmatpush1.bf16.msra.mxu0 %v1430
        %1454 = vmatprep.subr.bf16.mxu0 0
        %1455 = vmatpush2.bf16.msra.mxu0 0
        %1456 = vmatprep.subr.bf16.mxu0 0
        %1457 = vmatpush2.bf16.msra.mxu0 0
        %1458 = vmatprep.subr.bf16.mxu0 0
        %1459 = vmatpush2.bf16.msra.mxu0 0
        %1460 = vmatprep.subr.bf16.mxu0 0
        %1461 = vmatpush2.bf16.msra.mxu0 0
        %1462 = vmatprep.subr.bf16.mxu0 0
        %1463 = vmatpush2.bf16.msra.mxu0 0
        %1464 = vmatprep.subr.bf16.mxu0 0
        %1465 = vmatpush2.bf16.msra.mxu0 0
        %1466 = vmatprep.subr.bf16.mxu0 0
        %1467 = vmatpush2.bf16.msra.mxu0 0
        %1468 = vmatprep.subr.bf16.mxu0 0
        %1469 = vmatpush2.bf16.msra.mxu0 0
        %1470 = vmatprep.mubr.bf16.mxu0 0
        %1471 = vmatmul.mubr.bf16.gmra.mxu0 %v1436
        %v1472 = vpop.f32.mrf.mxu0
        %v1473 = vadd.f32 %v1420, %v1472
        %v1474 = vpop.f32.mrf.mxu0
        %v1475 = vpop.f32.mrf.mxu0
        %v1476 = vadd.f32 %v1420, %v1475
        %v1477 = vpop.f32.mrf.mxu0
        %1478 = vdwg.mxu0
        %1479 = vst [vmem:[%s447] sm:$0xff] %v1473
        %1480 = vst [vmem:[%s447 + $0x8] sm:$0xff] %v1476
        %s1481 = sand.u32 %s272, 1
        %s1482 = scalar_lea.sflag [#allocation4], %s1481
        %s1483 = sand.u32 %s272, 1
        %s1484 = smul.addr %s1483, 16
        %s1485 = scalar_lea.vmem [#allocation11], %s1484
        // Predicated region
        $region85: #{tpu_custom_call.1} parent=63 // pred_check
          %p1486 = pneg %p282
        $region86: #{tpu_custom_call.1} parent=63 // pred_check_branch
          %1488 = sbr.rel (%p1486) target = $region88
        $region87: #{tpu_custom_call.1} parent=63 // pred_region
          %s1489 = smul.u32 2, %s28
          %s1491 = ssub.s32 256, 256
          %1492 = vsyncadd %s1482, %s1491
          %s1493 = smul.addr %s1489, 128
          %s1494 = scalar_lea.hbm %s11, %s1493
          %s1495 = sshll.u32 %s1485, 4
          %s1496 = int_to_ptr.vmem [resolvable:$true] %s1495
          %1501 = dma.vmem_to_hbm [thread:$0]  %s1496, 256, %s1494, %s1482, 128, 128, 8
        $region88: #{tpu_custom_call.1} parent=63 // pred_fallthru
          _
      $region64: #{tpu_custom_call.1} parent=5 // pred_fallthru
        _
      %p1502 = scmp.le.s32.totalorder 2, %s23
      // Predicated region
      $region89: #{tpu_custom_call.1} parent=5 // pred_check
        %p1503 = pneg %p1502
      $region90: #{tpu_custom_call.1} parent=5 // pred_check_branch
        %1505 = sbr.rel (%p1503) target = $region92
      $region91: #{tpu_custom_call.1} parent=5 // pred_region
        %s1506 = ssub.s32 %s23, 2
        // Predicated region
        $region93: #{tpu_custom_call.1} parent=91 // pred_check
          %p1507 = pneg %p288
        $region94: #{tpu_custom_call.1} parent=91 // pred_check_branch
          %1509 = sbr.rel (%p1507) target = $region96
        $region95: #{tpu_custom_call.1} parent=91 // pred_region
          %s1510 = sand.u32 %s273, 1
          %s1511 = scalar_lea.sflag [#allocation4], %s1510
          %s1512 = sand.u32 %s273, 1
          %s1513 = smul.addr %s1512, 16
          %s1514 = scalar_lea.vmem [#allocation11], %s1513
          %1515 = dma.done %s1511, 256
        $region96: #{tpu_custom_call.1} parent=91 // pred_fallthru
          _
      $region92: #{tpu_custom_call.1} parent=5 // pred_fallthru
        _
    $region6: #{tpu_custom_call.1} parent=1 // loop_footer
      %s27 = sadd.s32 1, %s23
    $region7: #{tpu_custom_call.1} parent=1 // loop_footer_branch
      %22 = sbr.rel target = $region3
    $region8: #{tpu_custom_call.1} parent=1 // loop_exit
      _
    %1516 = vsyncpa [#allocation3], 1
    %s1517 = scalar_lea.sflag [#allocation3], 1
    %1518 = vsyncpa %s1517, 1
    %1519 = vsyncpa [#allocation6], 1
    %1520 = vsyncpa [#allocation9], 1
    %1521 = vsyncpa [#allocation4], 1
    %s1522 = scalar_lea.sflag [#allocation4], 1
    %1523 = vsyncpa %s1522, 1

</llo_original>
